<compile_context>
chip_gen: v7x
topology: tpu7x:2x2x1
jax: 0.10.0
libtpu: 0.0.40
codegen_flags: <defaults>
</compile_context>

<pallas_src>
import functools
import math

import jax
import jax.numpy as jnp
from jax import lax
from jax.experimental import pallas as pl
from jax.experimental.pallas import tpu as pltpu


def _round_up(x, m):
    return (x + m - 1) // m * m


def _choose_row_tile(seq_len, batch_pad, max_rows=512):
    """Largest k dividing seq_len with k*batch_pad <= max_rows (k >= 1)."""
    k_best = 1
    for k in range(1, seq_len + 1):
        if seq_len % k == 0 and k * batch_pad <= max_rows:
            k_best = k
    return k_best * batch_pad


# ----------------------------------------------------------------------------
# Fused kernel.  One grid step == one layer.
#   x_hbm    : (T*B_pad, D_pad)   input, memory_space=ANY (HBM, manual DMA)
#   w_ref    : (1, K_pad, H_pad)  this layer's fc weight (zero padded)
#   p_ref    : (1, 8, H_pad)      rows 0..3 = bias, gamma, beta, whh
#   clsw_ref : (H_pad, C_pad)     classifier weight
#   clsb_ref : (1, C_pad)         classifier bias
#   out_ref  : (B_pad, C_pad)     logits (written only at the last layer)
#   act_ref  : (T*B_pad, H_pad)   resident activation slab (VMEM scratch)
#   xbuf     : (2, R, D_pad)      layer-0 input double buffer
#   xsem     : DMA sems (2,)
#   sum_ref / ssq_ref : (1, H_pad) BN statistics accumulators
# ----------------------------------------------------------------------------
def _stacked_indrnn_kernel(x_hbm, w_ref, p_ref, clsw_ref, clsb_ref, out_ref,
                           act_ref, xbuf, xsem, sum_ref, ssq_ref, *,
                           seq_len, batch, batch_pad, d_pad, hidden_pad,
                           num_layers, row_tile, compute_dtype):
    layer = pl.program_id(0)
    H = hidden_pad
    R = row_tile
    TB = seq_len * batch_pad
    nt = TB // R
    inv_n = 1.0 / float(seq_len * batch)

    prm = p_ref[0]                       # (8, H) packed per-layer parameters
    bias = prm[0:1, :]
    gamma = prm[1:2, :]
    beta = prm[2:3, :]
    whh = prm[3:4, :]

    # Fresh BN statistics for this layer (scratch persists across grid steps).
    sum_ref[...] = jnp.zeros_like(sum_ref)
    ssq_ref[...] = jnp.zeros_like(ssq_ref)

    # Mask padded batch rows only inside the statistics (and slab store), so
    # padded rows never pollute BN stats.  Skipped entirely if B == B_pad.
    if batch == batch_pad:
        row_mask = None
    else:
        rid = lax.broadcasted_iota(jnp.int32, (R, 1), 0)
        row_mask = (rid % batch_pad) < batch

    def process_tile(i, xin, w):
        """Matmul one row tile, accumulate BN stats, store raw y into slab."""
        y = jnp.dot(xin.astype(compute_dtype), w.astype(compute_dtype),
                    preferred_element_type=jnp.float32) + bias
        if row_mask is not None:
            y = jnp.where(row_mask, y, 0.0)
        sum_ref[...] += jnp.sum(y, axis=0, keepdims=True)
        ssq_ref[...] += jnp.sum(y * y, axis=0, keepdims=True)
        r = pl.multiple_of(i * R, 8)
        act_ref[pl.ds(r, R), :] = y

    # ---- Linear_overtime + one-pass BN statistics, row tiled ---------------
    @pl.when(layer == 0)
    def _():
        # Layer 0 contracts over D_pad; x tiles are manually double-buffer
        # DMA'd from HBM so compute overlaps the loads.
        w0 = w_ref[0, pl.ds(0, d_pad), :]                  # (D_pad, H)

        def fetch(i, slot):
            pltpu.make_async_copy(x_hbm.at[pl.ds(i * R, R), :],
                                  xbuf.at[slot], xsem.at[slot]).start()

        fetch(0, 0)

        def body(i, carry):
            slot = i % 2
            pltpu.make_async_copy(x_hbm.at[pl.ds(i * R, R), :],
                                  xbuf.at[slot], xsem.at[slot]).wait()

            @pl.when(i + 1 < nt)
            def _():
                fetch(i + 1, 1 - slot)

            process_tile(i, xbuf[slot], w0)
            return carry

        lax.fori_loop(0, nt, body, 0)

    @pl.when(layer != 0)
    def _():
        # Layers >= 1 read the previous layer's hidden states already resident
        # in the slab and contract over H_pad only.
        wl = w_ref[0, pl.ds(0, H), :]                      # (H, H)

        def body(i, carry):
            r = pl.multiple_of(i * R, 8)
            process_tile(i, act_ref[pl.ds(r, R), :], wl)
            return carry

        lax.fori_loop(0, nt, body, 0)

    # ---- BN affine folded into the IndRNN recurrence ------------------------
    mean = sum_ref[...] * inv_n
    var = jnp.maximum(ssq_ref[...] * inv_n - mean * mean, 0.0)
    a = gamma * lax.rsqrt(var + 1e-5)          # yn = a*y + c
    c = beta - a * mean

    h0 = jnp.zeros((batch_pad, H), jnp.float32)
    unroll = seq_len if seq_len <= 16 else 8

    def make_step(store_back):
        def step(t, h):
            r = pl.multiple_of(t * batch_pad, 8)
            pre = act_ref[pl.ds(r, batch_pad), :]
            h_new = jnp.maximum(a * pre + c + whh * h, 0.0)
            if store_back:
                act_ref[pl.ds(r, batch_pad), :] = h_new
            return h_new
        return step

    @pl.when(layer < num_layers - 1)
    def _():
        # Hidden states feed the next layer's matmul -> write back to the slab.
        lax.fori_loop(0, seq_len, make_step(True), h0, unroll=unroll)

    @pl.when(layer == num_layers - 1)
    def _():
        # Last layer: no per-step write-back; fuse the classifier on h_last.
        h_last = lax.fori_loop(0, seq_len, make_step(False), h0, unroll=unroll)
        out_ref[...] = (jnp.dot(h_last.astype(compute_dtype),
                                clsw_ref[...].astype(compute_dtype),
                                preferred_element_type=jnp.float32)
                        + clsb_ref[...])


# ----------------------------------------------------------------------------
# Host-side wrapper: pad / stack params, run one fused pallas_call, un-pad.
# ----------------------------------------------------------------------------
def stacked_indrnn_forward(x, params, *, compute_dtype=jnp.bfloat16,
                           max_tile_rows=512):
    """x: (T, B, input_size) -> (B, outputclass)."""
    T, B, D = x.shape
    layers = params["layers"]
    L = len(layers)
    H = layers[0]["W"].shape[1]
    C = params["cls_W"].shape[1]

    B_pad = _round_up(B, 8)
    H_pad = _round_up(H, 128)
    D_pad = _round_up(D, 128)
    K_pad = max(D_pad, H_pad)
    C_pad = _round_up(C, 128)
    TB = T * B_pad
    R = _choose_row_tile(T, B_pad, max_tile_rows)

    # Padded input, (T*B_pad, D_pad), zeros elsewhere; stays in HBM (pl.ANY).
    x_p = jnp.zeros((T, B_pad, D_pad), jnp.float32)
    x_p = x_p.at[:, :B, :D].set(x.astype(jnp.float32)).reshape(TB, D_pad)

    # Stack + zero-pad per-layer parameters; pack the four small per-channel
    # vectors into one (L, 8, H_pad) array (single small DMA per layer).
    W_stack = jnp.zeros((L, K_pad, H_pad), jnp.float32)
    p_stack = jnp.zeros((L, 8, H_pad), jnp.float32)
    for i, lyr in enumerate(layers):
        Din = lyr["W"].shape[0]
        W_stack = W_stack.at[i, :Din, :H].set(lyr["W"])
        p_stack = p_stack.at[i, 0, :H].set(lyr["b"][0])
        p_stack = p_stack.at[i, 1, :H].set(lyr["gamma"][0])
        p_stack = p_stack.at[i, 2, :H].set(lyr["beta"][0])
        p_stack = p_stack.at[i, 3, :H].set(lyr["whh"][0])

    cls_W_p = jnp.zeros((H_pad, C_pad), jnp.float32).at[:H, :C].set(
        params["cls_W"])
    cls_b_p = jnp.zeros((1, C_pad), jnp.float32).at[0, :C].set(
        params["cls_b"][0])

    grid_spec = pltpu.PrefetchScalarGridSpec(
        num_scalar_prefetch=0,
        grid=(L,),
        in_specs=[
            pl.BlockSpec(memory_space=pl.ANY),                      # x (HBM)
            pl.BlockSpec((1, K_pad, H_pad), lambda l: (l, 0, 0)),   # W
            pl.BlockSpec((1, 8, H_pad), lambda l: (l, 0, 0)),       # b/g/be/whh
            pl.BlockSpec((H_pad, C_pad), lambda l: (0, 0)),         # cls W
            pl.BlockSpec((1, C_pad), lambda l: (0, 0)),             # cls b
        ],
        out_specs=pl.BlockSpec((B_pad, C_pad), lambda l: (0, 0)),
        scratch_shapes=[
            pltpu.VMEM((TB, H_pad), jnp.float32),     # resident activation slab
            pltpu.VMEM((2, R, D_pad), jnp.float32),   # layer-0 x double buffer
            pltpu.SemaphoreType.DMA((2,)),
            pltpu.VMEM((1, H_pad), jnp.float32),      # BN sum
            pltpu.VMEM((1, H_pad), jnp.float32),      # BN sum of squares
        ],
    )

    # VMEM budget from the actual buffer set, capped below physical VMEM with
    # headroom (v7x ~54 MiB, v5e/v6e ~100+ MiB for large problems).
    est = 4 * (TB * H_pad + 2 * R * D_pad + 2 * K_pad * H_pad + 2 * 8 * H_pad
               + 2 * (H_pad * C_pad + C_pad) + 2 * B_pad * C_pad + 16 * H_pad)
    try:
        vmem_cap = int(pltpu.get_tpu_info().vmem_capacity_bytes)
    except Exception:
        vmem_cap = 64 * 2 ** 20
    vmem_limit = int(min(0.85 * vmem_cap,
                         max(2 * est + (2 << 20), 32 * 2 ** 20)))

    kernel = functools.partial(
        _stacked_indrnn_kernel, seq_len=T, batch=B, batch_pad=B_pad,
        d_pad=D_pad, hidden_pad=H_pad, num_layers=L, row_tile=R,
        compute_dtype=compute_dtype)

    out_p = pl.pallas_call(
        kernel,
        out_shape=jax.ShapeDtypeStruct((B_pad, C_pad), jnp.float32),
        grid_spec=grid_spec,
        compiler_params=pltpu.CompilerParams(
            dimension_semantics=("arbitrary",),     # layers are sequential
            vmem_limit_bytes=vmem_limit),
    )(x_p, W_stack, p_stack, cls_W_p, cls_b_p)

    return out_p[:B, :C]


# ----------------------------------------------------------------------------
# Pure-JAX reference for the correctness check.
# ----------------------------------------------------------------------------
def reference_forward(x, params):
    T, B, _ = x.shape
    out = x
    for layer in params["layers"]:
        y = jnp.einsum("tbd,dh->tbh", out, layer["W"]) + layer["b"][0]
        mean = jnp.mean(y, axis=(0, 1), keepdims=True)
        var = jnp.mean((y - mean) ** 2, axis=(0, 1), keepdims=True)
        yn = (y - mean) * lax.rsqrt(var + 1e-5) * layer["gamma"][0] + layer["beta"][0]
        h = jnp.zeros((B, layer["W"].shape[1]), jnp.float32)
        hs = []
        for t in range(T):
            h = jnp.maximum(yn[t] + layer["whh"][0] * h, 0.0)
            hs.append(h)
        out = jnp.stack(hs, axis=0)
    return out[-1] @ params["cls_W"] + params["cls_b"][0]


# ----------------------------------------------------------------------------
# Deterministic parameter init mirroring stackedIndRNN_encoder.init_weights
# ----------------------------------------------------------------------------
def init_params(key, *, input_size, hidden_size, num_layers, outputclass,
                seq_len, MAG=5.0):
    U_bound = 10.0 ** (math.log10(MAG) / seq_len)     # weight_hh ~ U(0, U_bound)
    layers = []
    in_dim = input_size
    for _ in range(num_layers):
        key, k_w, k_hh = jax.random.split(key, 3)
        # fc weight: kaiming_uniform_(a=8, fan_in)
        bound = math.sqrt(6.0 / ((1.0 + 8.0 ** 2) * in_dim))
        W = jax.random.uniform(k_w, (in_dim, hidden_size), jnp.float32,
                               minval=-bound, maxval=bound)
        b = jnp.zeros((1, hidden_size), jnp.float32)
        gamma = jnp.ones((1, hidden_size), jnp.float32)   # BN weight -> 1
        beta = jnp.zeros((1, hidden_size), jnp.float32)   # BN bias   -> 0
        whh = jax.random.uniform(k_hh, (1, hidden_size), jnp.float32,
                                 minval=0.0, maxval=U_bound)
        layers.append(dict(W=W, b=b, gamma=gamma, beta=beta, whh=whh))
        in_dim = hidden_size
    key, k_c = jax.random.split(key)
    # classifier: kaiming_normal_ (fan_in, gain sqrt(2)), bias -> 0
    std = math.sqrt(2.0 / hidden_size)
    cls_W = jax.random.normal(k_c, (hidden_size, outputclass), jnp.float32) * std
    cls_b = jnp.zeros((1, outputclass), jnp.float32)
    return dict(layers=layers, cls_W=cls_W, cls_b=cls_b)


if __name__ == "__main__":
    seq_len, batch, input_size = 8, 2, 16
    hidden_size, num_layers, outputclass = 32, 2, 10

    key = jax.random.PRNGKey(0)
    key, k_x = jax.random.split(key)
    x = jax.random.normal(k_x, (seq_len, batch, input_size), jnp.float32)

    params = init_params(key, input_size=input_size, hidden_size=hidden_size,
                         num_layers=num_layers, outputclass=outputclass,
                         seq_len=seq_len)

    ref = jax.block_until_ready(reference_forward(x, params))

    # Exact check with f32 MXU operands.
    out_f32 = jax.block_until_ready(
        stacked_indrnn_forward(x, params, compute_dtype=jnp.float32))
    assert out_f32.shape == (batch, outputclass)
    assert jnp.allclose(out_f32, ref, atol=1e-4, rtol=1e-4), "f32 mismatch"

    # Default bf16-MXU fast path (v6e/v7x); loose sanity check.
    out_bf16 = jax.block_until_ready(stacked_indrnn_forward(x, params))
    assert out_bf16.shape == (batch, outputclass)
    assert bool(jnp.all(jnp.isfinite(out_bf16)))
    assert jnp.allclose(out_bf16, ref, atol=0.5), "bf16 path diverged"

    print("KERNEL_OK")
</pallas_src>

<mosaic_0001>
module attributes {stable_mosaic.version = 11 : i64} {
  func.func @_stacked_indrnn_kernel(%arg0: i32, %arg1: memref<64x128xf32, #tpu.memory_space<any>>, %arg2: memref<1x128x128xf32, #tpu.memory_space<vmem>>, %arg3: memref<1x8x128xf32, #tpu.memory_space<vmem>>, %arg4: memref<128x128xf32, #tpu.memory_space<vmem>>, %arg5: memref<1x128xf32, #tpu.memory_space<vmem>>, %arg6: memref<8x128xf32, #tpu.memory_space<vmem>>, %arg7: memref<64x128xf32, #tpu.memory_space<vmem>>, %arg8: memref<2x64x128xf32, #tpu.memory_space<vmem>>, %arg9: memref<2x!tpu.dma_semaphore, #tpu.memory_space<semaphore_mem>>, %arg10: memref<1x128xf32, #tpu.memory_space<vmem>>, %arg11: memref<1x128xf32, #tpu.memory_space<vmem>>) attributes {dimension_semantics = [#tpu.dimension_semantics<arbitrary>], iteration_bounds = array<i64: 2>, scalar_prefetch = 0 : i64, scratch_operands = 5 : i64, tpu.core_type = #tpu.core_type<tc>, window_params = [{}, {transform_indices = @transform_1, window_bounds = array<i64: 1, 128, 128>}, {transform_indices = @transform_2, window_bounds = array<i64: 1, 8, 128>}, {pipeline_mode = #tpu.pipeline_mode<synchronous>, transform_indices = @transform_3, window_bounds = array<i64: 128, 128>}, {pipeline_mode = #tpu.pipeline_mode<synchronous>, transform_indices = @transform_4, window_bounds = array<i64: 1, 128>}, {pipeline_mode = #tpu.pipeline_mode<synchronous>, transform_indices = @transform_5, window_bounds = array<i64: 8, 128>}]} {
    %c0 = arith.constant 0 : index
    %c0_0 = arith.constant 0 : index
    %c0_1 = arith.constant 0 : index
    %0 = vector.load %arg3[%c0, %c0_0, %c0_1] : memref<1x8x128xf32, #tpu.memory_space<vmem>>, vector<1x8x128xf32>
    %1 = vector.shape_cast %0 : vector<1x8x128xf32> to vector<8x128xf32>
    %2 = vector.extract_strided_slice %1 {offsets = [0, 0], sizes = [1, 128], strides = [1, 1]} : vector<8x128xf32> to vector<1x128xf32>
    %3 = vector.extract_strided_slice %1 {offsets = [1, 0], sizes = [1, 128], strides = [1, 1]} : vector<8x128xf32> to vector<1x128xf32>
    %4 = vector.extract_strided_slice %1 {offsets = [2, 0], sizes = [1, 128], strides = [1, 1]} : vector<8x128xf32> to vector<1x128xf32>
    %5 = vector.extract_strided_slice %1 {offsets = [3, 0], sizes = [1, 128], strides = [1, 1]} : vector<8x128xf32> to vector<1x128xf32>
    %cst = arith.constant 0.000000e+00 : f32
    %6 = vector.broadcast %cst : f32 to vector<1x128xf32>
    %c0_2 = arith.constant 0 : index
    %c0_3 = arith.constant 0 : index
    %7 = vector.load %arg10[%c0_2, %c0_3] : memref<1x128xf32, #tpu.memory_space<vmem>>, vector<1x128xf32>
    tpu.vector_store %arg10[%c0_2, %c0_3], %6 {strides = array<i32>} : memref<1x128xf32, #tpu.memory_space<vmem>>, vector<1x128xf32>,
    %cst_4 = arith.constant 0.000000e+00 : f32
    %8 = vector.broadcast %cst_4 : f32 to vector<1x128xf32>
    %c0_5 = arith.constant 0 : index
    %c0_6 = arith.constant 0 : index
    %9 = vector.load %arg11[%c0_5, %c0_6] : memref<1x128xf32, #tpu.memory_space<vmem>>, vector<1x128xf32>
    tpu.vector_store %arg11[%c0_5, %c0_6], %8 {strides = array<i32>} : memref<1x128xf32, #tpu.memory_space<vmem>>, vector<1x128xf32>,
    %10 = tpu.iota {dimensions = array<i32: 0>} : vector<64x1xi32>
    %c8_i32 = arith.constant 8 : i32
    %c0_i32 = arith.constant 0 : i32
    %11 = arith.cmpi eq, %c8_i32, %c0_i32 : i32
    %c1_i32 = arith.constant 1 : i32
    %12 = arith.select %11, %c1_i32, %c8_i32 : i32
    %13 = vector.broadcast %12 : i32 to vector<64x1xi32>
    %14 = arith.remsi %10, %13 : vector<64x1xi32>
    %c0_i32_7 = arith.constant 0 : i32
    %15 = vector.broadcast %c0_i32_7 : i32 to vector<64x1xi32>
    %16 = arith.cmpi ne, %14, %15 : vector<64x1xi32>
    %c0_i32_8 = arith.constant 0 : i32
    %17 = vector.broadcast %c0_i32_8 : i32 to vector<64x1xi32>
    %18 = arith.cmpi slt, %14, %17 : vector<64x1xi32>
    %c0_i32_9 = arith.constant 0 : i32
    %19 = arith.cmpi slt, %12, %c0_i32_9 : i32
    %20 = vector.broadcast %19 : i1 to vector<64x1xi1>
    %21 = vector.broadcast %20 : vector<64x1xi1> to vector<64x1xi1>
    %22 = arith.xori %18, %21 : vector<64x1xi1>
    %23 = arith.andi %22, %16 : vector<64x1xi1>
    %24 = vector.broadcast %12 : i32 to vector<64x1xi32>
    %25 = arith.addi %14, %24 : vector<64x1xi32>
    %26 = arith.select %23, %25, %14 : vector<64x1xi1>, vector<64x1xi32>
    %c2_i32 = arith.constant 2 : i32
    %27 = vector.broadcast %c2_i32 : i32 to vector<64x1xi32>
    %28 = arith.cmpi slt, %26, %27 : vector<64x1xi32>
    %c0_i32_10 = arith.constant 0 : i32
    %29 = arith.cmpi eq, %arg0, %c0_i32_10 : i32
    %30 = arith.extui %29 : i1 to i32
    %c0_i32_11 = arith.constant 0 : i32
    %31 = arith.cmpi ne, %30, %c0_i32_11 : i32
    scf.if %31 {
      %c0_27 = arith.constant 0 : index
      %c0_28 = arith.constant 0 : index
      %c0_29 = arith.constant 0 : index
      %58 = vector.load %arg2[%c0_27, %c0_28, %c0_29] : memref<1x128x128xf32, #tpu.memory_space<vmem>>, vector<1x128x128xf32>
      %59 = vector.shape_cast %58 : vector<1x128x128xf32> to vector<128x128xf32>
      %c0_i32_30 = arith.constant 0 : i32
      %c0_i32_31 = arith.constant 0 : i32
      %c0_i32_32 = arith.constant 0 : i32
      %c0_i32_33 = arith.constant 0 : i32
      %60 = tpu.memref_slice %arg1[%c0_i32_32, %c0_i32_33] : memref<64x128xf32, #tpu.memory_space<any>> -> memref<64x128xf32, #tpu.memory_space<any>>
      %c0_i32_34 = arith.constant 0 : i32
      %c0_i32_35 = arith.constant 0 : i32
      %61 = tpu.memref_slice %arg8[%c0_i32_30, %c0_i32_34, %c0_i32_35] : memref<2x64x128xf32, #tpu.memory_space<vmem>> -> memref<1x64x128xf32, #tpu.memory_space<vmem>>
      %62 = tpu.memref_squeeze %61 : memref<1x64x128xf32, #tpu.memory_space<vmem>> -> memref<64x128xf32, #tpu.memory_space<vmem>>
      %63 = tpu.memref_slice %arg9[%c0_i32_31] : memref<2x!tpu.dma_semaphore, #tpu.memory_space<semaphore_mem>> -> memref<1x!tpu.dma_semaphore, #tpu.memory_space<semaphore_mem>>
      %64 = tpu.memref_squeeze %63 : memref<1x!tpu.dma_semaphore, #tpu.memory_space<semaphore_mem>> -> memref<!tpu.dma_semaphore, #tpu.memory_space<semaphore_mem>>
      tpu.enqueue_dma source(%60 : memref<64x128xf32, #tpu.memory_space<any>>) target(%62 : memref<64x128xf32, #tpu.memory_space<vmem>>) target_semaphore(%64 : memref<!tpu.dma_semaphore, #tpu.memory_space<semaphore_mem>>)
      %c0_i32_36 = arith.constant 0 : i32
      %c2_i32_37 = arith.constant 2 : i32
      %c0_i32_38 = arith.constant 0 : i32
      %65 = arith.cmpi eq, %c2_i32_37, %c0_i32_38 : i32
      %c1_i32_39 = arith.constant 1 : i32
      %66 = arith.select %65, %c1_i32_39, %c2_i32_37 : i32
      %67 = arith.remsi %c0_i32_36, %66 : i32
      %c0_i32_40 = arith.constant 0 : i32
      %68 = arith.cmpi ne, %67, %c0_i32_40 : i32
      %c0_i32_41 = arith.constant 0 : i32
      %69 = arith.cmpi slt, %67, %c0_i32_41 : i32
      %c0_i32_42 = arith.constant 0 : i32
      %70 = arith.cmpi slt, %66, %c0_i32_42 : i32
      %71 = arith.xori %69, %70 : i1
      %72 = arith.andi %71, %68 : i1
      %73 = arith.addi %67, %66 : i32
      %74 = arith.select %72, %73, %67 : i32
      %c64_i32 = arith.constant 64 : i32
      %75 = arith.muli %c0_i32_36, %c64_i32 : i32
      %c0_i32_43 = arith.constant 0 : i32
      %76 = tpu.memref_slice %arg1[%75, %c0_i32_43] : memref<64x128xf32, #tpu.memory_space<any>> -> memref<64x128xf32, #tpu.memory_space<any>>
      %c0_i32_44 = arith.constant 0 : i32
      %c0_i32_45 = arith.constant 0 : i32
      %77 = tpu.memref_slice %arg8[%74, %c0_i32_44, %c0_i32_45] : memref<2x64x128xf32, #tpu.memory_space<vmem>> -> memref<1x64x128xf32, #tpu.memory_space<vmem>>
      %78 = tpu.memref_squeeze %77 : memref<1x64x128xf32, #tpu.memory_space<vmem>> -> memref<64x128xf32, #tpu.memory_space<vmem>>
      %79 = tpu.memref_slice %arg9[%74] : memref<2x!tpu.dma_semaphore, #tpu.memory_space<semaphore_mem>> -> memref<1x!tpu.dma_semaphore, #tpu.memory_space<semaphore_mem>>
      %80 = tpu.memref_squeeze %79 : memref<1x!tpu.dma_semaphore, #tpu.memory_space<semaphore_mem>> -> memref<!tpu.dma_semaphore, #tpu.memory_space<semaphore_mem>>
      tpu.wait_dma2 semaphore(%80 : memref<!tpu.dma_semaphore, #tpu.memory_space<semaphore_mem>>) src(%76 : memref<64x128xf32, #tpu.memory_space<any>>) dst(%78 : memref<64x128xf32, #tpu.memory_space<vmem>>)
      %c1_i32_46 = arith.constant 1 : i32
      %81 = arith.addi %c0_i32_36, %c1_i32_46 : i32
      %c1_i32_47 = arith.constant 1 : i32
      %82 = arith.cmpi slt, %81, %c1_i32_47 : i32
      %83 = arith.extui %82 : i1 to i32
      %c0_i32_48 = arith.constant 0 : i32
      %84 = arith.cmpi ne, %83, %c0_i32_48 : i32
      scf.if %84 {
        %c1_i32_66 = arith.constant 1 : i32
        %110 = arith.addi %c0_i32_36, %c1_i32_66 : i32
        %c1_i32_67 = arith.constant 1 : i32
        %111 = arith.subi %c1_i32_67, %74 : i32
        %c64_i32_68 = arith.constant 64 : i32
        %112 = arith.muli %110, %c64_i32_68 : i32
        %c0_i32_69 = arith.constant 0 : i32
        %113 = tpu.memref_slice %arg1[%112, %c0_i32_69] : memref<64x128xf32, #tpu.memory_space<any>> -> memref<64x128xf32, #tpu.memory_space<any>>
        %c0_i32_70 = arith.constant 0 : i32
        %c0_i32_71 = arith.constant 0 : i32
        %114 = tpu.memref_slice %arg8[%111, %c0_i32_70, %c0_i32_71] : memref<2x64x128xf32, #tpu.memory_space<vmem>> -> memref<1x64x128xf32, #tpu.memory_space<vmem>>
        %115 = tpu.memref_squeeze %114 : memref<1x64x128xf32, #tpu.memory_space<vmem>> -> memref<64x128xf32, #tpu.memory_space<vmem>>
        %116 = tpu.memref_slice %arg9[%111] : memref<2x!tpu.dma_semaphore, #tpu.memory_space<semaphore_mem>> -> memref<1x!tpu.dma_semaphore, #tpu.memory_space<semaphore_mem>>
        %117 = tpu.memref_squeeze %116 : memref<1x!tpu.dma_semaphore, #tpu.memory_space<semaphore_mem>> -> memref<!tpu.dma_semaphore, #tpu.memory_space<semaphore_mem>>
        tpu.enqueue_dma source(%113 : memref<64x128xf32, #tpu.memory_space<any>>) target(%115 : memref<64x128xf32, #tpu.memory_space<vmem>>) target_semaphore(%117 : memref<!tpu.dma_semaphore, #tpu.memory_space<semaphore_mem>>)
      } else {
      }
      %85 = arith.index_cast %74 : i32 to index
      %c0_49 = arith.constant 0 : index
      %c0_50 = arith.constant 0 : index
      %86 = vector.load %arg8[%85, %c0_49, %c0_50] : memref<2x64x128xf32, #tpu.memory_space<vmem>>, vector<1x64x128xf32>
      %87 = vector.shape_cast %86 : vector<1x64x128xf32> to vector<64x128xf32>
      %cst_51 = arith.constant dense<0.000000e+00> : vector<64x128xf32>
      %88 = tpu.matmul %87, %59, %cst_51 {dimension_numbers = #tpu.dot_dimension_numbers<[1], [0], [0], [1], [0, 0, 1, 1], [], []>} : vector<64x128xf32>, vector<128x128xf32>, vector<64x128xf32> -> vector<64x128xf32>
      %89 = vector.broadcast %2 : vector<1x128xf32> to vector<64x128xf32>
      %90 = arith.addf %88, %89 : vector<64x128xf32>
      %cst_52 = arith.constant 0.000000e+00 : f32
      %91 = vector.shape_cast %28 : vector<64x1xi1> to vector<64x1xi1>
      %92 = vector.broadcast %91 : vector<64x1xi1> to vector<64x128xi1>
      %93 = vector.broadcast %cst_52 : f32 to vector<64x128xf32>
      %94 = arith.select %92, %90, %93 : vector<64x128xi1>, vector<64x128xf32>
      %c0_53 = arith.constant 0 : index
      %c0_54 = arith.constant 0 : index
      %95 = vector.load %arg10[%c0_53, %c0_54] : memref<1x128xf32, #tpu.memory_space<vmem>>, vector<1x128xf32>
      %cst_55 = arith.constant dense<0.000000e+00> : vector<128xf32>
      %96 = vector.multi_reduction <add>, %94, %cst_55 [0] : vector<64x128xf32> to vector<128xf32>
      %97 = vector.shape_cast %96 : vector<128xf32> to vector<1x128xf32>
      %98 = arith.addf %95, %97 : vector<1x128xf32>
      %c0_56 = arith.constant 0 : index
      %c0_57 = arith.constant 0 : index
      %99 = vector.load %arg10[%c0_56, %c0_57] : memref<1x128xf32, #tpu.memory_space<vmem>>, vector<1x128xf32>
      tpu.vector_store %arg10[%c0_56, %c0_57], %98 {strides = array<i32>} : memref<1x128xf32, #tpu.memory_space<vmem>>, vector<1x128xf32>,
      %c0_58 = arith.constant 0 : index
      %c0_59 = arith.constant 0 : index
      %100 = vector.load %arg11[%c0_58, %c0_59] : memref<1x128xf32, #tpu.memory_space<vmem>>, vector<1x128xf32>
      %101 = arith.mulf %94, %94 : vector<64x128xf32>
      %cst_60 = arith.constant dense<0.000000e+00> : vector<128xf32>
      %102 = vector.multi_reduction <add>, %101, %cst_60 [0] : vector<64x128xf32> to vector<128xf32>
      %103 = vector.shape_cast %102 : vector<128xf32> to vector<1x128xf32>
      %104 = arith.addf %100, %103 : vector<1x128xf32>
      %c0_61 = arith.constant 0 : index
      %c0_62 = arith.constant 0 : index
      %105 = vector.load %arg11[%c0_61, %c0_62] : memref<1x128xf32, #tpu.memory_space<vmem>>, vector<1x128xf32>
      tpu.vector_store %arg11[%c0_61, %c0_62], %104 {strides = array<i32>} : memref<1x128xf32, #tpu.memory_space<vmem>>, vector<1x128xf32>,
      %c64_i32_63 = arith.constant 64 : i32
      %106 = arith.muli %c0_i32_36, %c64_i32_63 : i32
      %107 = tpu.assume_multiple %106, 8 : i32
      %108 = arith.index_cast %107 : i32 to index
      %c0_64 = arith.constant 0 : index
      %109 = vector.load %arg7[%108, %c0_64] : memref<64x128xf32, #tpu.memory_space<vmem>>, vector<64x128xf32>
      tpu.vector_store %arg7[%108, %c0_64], %94 {strides = array<i32>} : memref<64x128xf32, #tpu.memory_space<vmem>>, vector<64x128xf32>,
      %c1_i32_65 = arith.constant 1 : i32
    } else {
    }
    %c0_i32_12 = arith.constant 0 : i32
    %32 = arith.cmpi ne, %arg0, %c0_i32_12 : i32
    %33 = arith.extui %32 : i1 to i32
    %c0_i32_13 = arith.constant 0 : i32
    %34 = arith.cmpi ne, %33, %c0_i32_13 : i32
    scf.if %34 {
      %c0_27 = arith.constant 0 : index
      %c0_28 = arith.constant 0 : index
      %c0_29 = arith.constant 0 : index
      %58 = vector.load %arg2[%c0_27, %c0_28, %c0_29] : memref<1x128x128xf32, #tpu.memory_space<vmem>>, vector<1x128x128xf32>
      %59 = vector.shape_cast %58 : vector<1x128x128xf32> to vector<128x128xf32>
      %c0_i32_30 = arith.constant 0 : i32
      %c64_i32 = arith.constant 64 : i32
      %60 = arith.muli %c0_i32_30, %c64_i32 : i32
      %61 = tpu.assume_multiple %60, 8 : i32
      %62 = arith.index_cast %61 : i32 to index
      %c0_31 = arith.constant 0 : index
      %63 = vector.load %arg7[%62, %c0_31] : memref<64x128xf32, #tpu.memory_space<vmem>>, vector<64x128xf32>
      %cst_32 = arith.constant dense<0.000000e+00> : vector<64x128xf32>
      %64 = tpu.matmul %63, %59, %cst_32 {dimension_numbers = #tpu.dot_dimension_numbers<[1], [0], [0], [1], [0, 0, 1, 1], [], []>} : vector<64x128xf32>, vector<128x128xf32>, vector<64x128xf32> -> vector<64x128xf32>
      %65 = vector.broadcast %2 : vector<1x128xf32> to vector<64x128xf32>
      %66 = arith.addf %64, %65 : vector<64x128xf32>
      %cst_33 = arith.constant 0.000000e+00 : f32
      %67 = vector.shape_cast %28 : vector<64x1xi1> to vector<64x1xi1>
      %68 = vector.broadcast %67 : vector<64x1xi1> to vector<64x128xi1>
      %69 = vector.broadcast %cst_33 : f32 to vector<64x128xf32>
      %70 = arith.select %68, %66, %69 : vector<64x128xi1>, vector<64x128xf32>
      %c0_34 = arith.constant 0 : index
      %c0_35 = arith.constant 0 : index
      %71 = vector.load %arg10[%c0_34, %c0_35] : memref<1x128xf32, #tpu.memory_space<vmem>>, vector<1x128xf32>
      %cst_36 = arith.constant dense<0.000000e+00> : vector<128xf32>
      %72 = vector.multi_reduction <add>, %70, %cst_36 [0] : vector<64x128xf32> to vector<128xf32>
      %73 = vector.shape_cast %72 : vector<128xf32> to vector<1x128xf32>
      %74 = arith.addf %71, %73 : vector<1x128xf32>
      %c0_37 = arith.constant 0 : index
      %c0_38 = arith.constant 0 : index
      %75 = vector.load %arg10[%c0_37, %c0_38] : memref<1x128xf32, #tpu.memory_space<vmem>>, vector<1x128xf32>
      tpu.vector_store %arg10[%c0_37, %c0_38], %74 {strides = array<i32>} : memref<1x128xf32, #tpu.memory_space<vmem>>, vector<1x128xf32>,
      %c0_39 = arith.constant 0 : index
      %c0_40 = arith.constant 0 : index
      %76 = vector.load %arg11[%c0_39, %c0_40] : memref<1x128xf32, #tpu.memory_space<vmem>>, vector<1x128xf32>
      %77 = arith.mulf %70, %70 : vector<64x128xf32>
      %cst_41 = arith.constant dense<0.000000e+00> : vector<128xf32>
      %78 = vector.multi_reduction <add>, %77, %cst_41 [0] : vector<64x128xf32> to vector<128xf32>
      %79 = vector.shape_cast %78 : vector<128xf32> to vector<1x128xf32>
      %80 = arith.addf %76, %79 : vector<1x128xf32>
      %c0_42 = arith.constant 0 : index
      %c0_43 = arith.constant 0 : index
      %81 = vector.load %arg11[%c0_42, %c0_43] : memref<1x128xf32, #tpu.memory_space<vmem>>, vector<1x128xf32>
      tpu.vector_store %arg11[%c0_42, %c0_43], %80 {strides = array<i32>} : memref<1x128xf32, #tpu.memory_space<vmem>>, vector<1x128xf32>,
      %c64_i32_44 = arith.constant 64 : i32
      %82 = arith.muli %c0_i32_30, %c64_i32_44 : i32
      %83 = tpu.assume_multiple %82, 8 : i32
      %84 = arith.index_cast %83 : i32 to index
      %c0_45 = arith.constant 0 : index
      %85 = vector.load %arg7[%84, %c0_45] : memref<64x128xf32, #tpu.memory_space<vmem>>, vector<64x128xf32>
      tpu.vector_store %arg7[%84, %c0_45], %70 {strides = array<i32>} : memref<64x128xf32, #tpu.memory_space<vmem>>, vector<64x128xf32>,
      %c1_i32_46 = arith.constant 1 : i32
    } else {
    }
    %c0_14 = arith.constant 0 : index
    %c0_15 = arith.constant 0 : index
    %35 = vector.load %arg10[%c0_14, %c0_15] : memref<1x128xf32, #tpu.memory_space<vmem>>, vector<1x128xf32>
    %cst_16 = arith.constant 6.250000e-02 : f32
    %36 = vector.broadcast %cst_16 : f32 to vector<1x128xf32>
    %37 = arith.mulf %35, %36 : vector<1x128xf32>
    %c0_17 = arith.constant 0 : index
    %c0_18 = arith.constant 0 : index
    %38 = vector.load %arg11[%c0_17, %c0_18] : memref<1x128xf32, #tpu.memory_space<vmem>>, vector<1x128xf32>
    %cst_19 = arith.constant 6.250000e-02 : f32
    %39 = vector.broadcast %cst_19 : f32 to vector<1x128xf32>
    %40 = arith.mulf %38, %39 : vector<1x128xf32>
    %41 = arith.mulf %37, %37 : vector<1x128xf32>
    %42 = arith.subf %40, %41 : vector<1x128xf32>
    %cst_20 = arith.constant 0.000000e+00 : f32
    %43 = vector.broadcast %cst_20 : f32 to vector<1x128xf32>
    %44 = arith.maximumf %42, %43 : vector<1x128xf32>
    %cst_21 = arith.constant 9.99999974E-6 : f32
    %45 = vector.broadcast %cst_21 : f32 to vector<1x128xf32>
    %46 = arith.addf %44, %45 : vector<1x128xf32>
    %47 = math.rsqrt %46 : vector<1x128xf32>
    %48 = arith.mulf %3, %47 : vector<1x128xf32>
    %49 = arith.mulf %48, %37 : vector<1x128xf32>
    %50 = arith.subf %4, %49 : vector<1x128xf32>
    %cst_22 = arith.constant 0.000000e+00 : f32
    %51 = vector.broadcast %cst_22 : f32 to vector<8x128xf32>
    %c1_i32_23 = arith.constant 1 : i32
    %52 = arith.cmpi slt, %arg0, %c1_i32_23 : i32
    %53 = arith.extui %52 : i1 to i32
    %c0_i32_24 = arith.constant 0 : i32
    %54 = arith.cmpi ne, %53, %c0_i32_24 : i32
    scf.if %54 {
      %c0_i32_27 = arith.constant 0 : i32
      %c8_i32_28 = arith.constant 8 : i32
      %58 = arith.muli %c0_i32_27, %c8_i32_28 : i32
      %59 = tpu.assume_multiple %58, 8 : i32
      %60 = arith.index_cast %59 : i32 to index
      %c0_29 = arith.constant 0 : index
      %61 = vector.load %arg7[%60, %c0_29] : memref<64x128xf32, #tpu.memory_space<vmem>>, vector<8x128xf32>
      %62 = vector.broadcast %48 : vector<1x128xf32> to vector<8x128xf32>
      %63 = arith.mulf %62, %61 : vector<8x128xf32>
      %64 = vector.broadcast %50 : vector<1x128xf32> to vector<8x128xf32>
      %65 = arith.addf %63, %64 : vector<8x128xf32>
      %66 = vector.broadcast %5 : vector<1x128xf32> to vector<8x128xf32>
      %67 = arith.mulf %66, %51 : vector<8x128xf32>
      %68 = arith.addf %65, %67 : vector<8x128xf32>
      %cst_30 = arith.constant 0.000000e+00 : f32
      %69 = vector.broadcast %cst_30 : f32 to vector<8x128xf32>
      %70 = arith.maximumf %68, %69 : vector<8x128xf32>
      %71 = arith.index_cast %59 : i32 to index
      %c0_31 = arith.constant 0 : index
      %72 = vector.load %arg7[%71, %c0_31] : memref<64x128xf32, #tpu.memory_space<vmem>>, vector<8x128xf32>
      tpu.vector_store %arg7[%71, %c0_31], %70 {strides = array<i32>} : memref<64x128xf32, #tpu.memory_space<vmem>>, vector<8x128xf32>,
      %c1_i32_32 = arith.constant 1 : i32
      %c8_i32_33 = arith.constant 8 : i32
      %73 = arith.muli %c1_i32_32, %c8_i32_33 : i32
      %74 = tpu.assume_multiple %73, 8 : i32
      %75 = arith.index_cast %74 : i32 to index
      %c0_34 = arith.constant 0 : index
      %76 = vector.load %arg7[%75, %c0_34] : memref<64x128xf32, #tpu.memory_space<vmem>>, vector<8x128xf32>
      %77 = vector.broadcast %48 : vector<1x128xf32> to vector<8x128xf32>
      %78 = arith.mulf %77, %76 : vector<8x128xf32>
      %79 = vector.broadcast %50 : vector<1x128xf32> to vector<8x128xf32>
      %80 = arith.addf %78, %79 : vector<8x128xf32>
      %81 = vector.broadcast %5 : vector<1x128xf32> to vector<8x128xf32>
      %82 = arith.mulf %81, %70 : vector<8x128xf32>
      %83 = arith.addf %80, %82 : vector<8x128xf32>
      %cst_35 = arith.constant 0.000000e+00 : f32
      %84 = vector.broadcast %cst_35 : f32 to vector<8x128xf32>
      %85 = arith.maximumf %83, %84 : vector<8x128xf32>
      %86 = arith.index_cast %74 : i32 to index
      %c0_36 = arith.constant 0 : index
      %87 = vector.load %arg7[%86, %c0_36] : memref<64x128xf32, #tpu.memory_space<vmem>>, vector<8x128xf32>
      tpu.vector_store %arg7[%86, %c0_36], %85 {strides = array<i32>} : memref<64x128xf32, #tpu.memory_space<vmem>>, vector<8x128xf32>,
      %c2_i32_37 = arith.constant 2 : i32
      %c8_i32_38 = arith.constant 8 : i32
      %88 = arith.muli %c2_i32_37, %c8_i32_38 : i32
      %89 = tpu.assume_multiple %88, 8 : i32
      %90 = arith.index_cast %89 : i32 to index
      %c0_39 = arith.constant 0 : index
      %91 = vector.load %arg7[%90, %c0_39] : memref<64x128xf32, #tpu.memory_space<vmem>>, vector<8x128xf32>
      %92 = vector.broadcast %48 : vector<1x128xf32> to vector<8x128xf32>
      %93 = arith.mulf %92, %91 : vector<8x128xf32>
      %94 = vector.broadcast %50 : vector<1x128xf32> to vector<8x128xf32>
      %95 = arith.addf %93, %94 : vector<8x128xf32>
      %96 = vector.broadcast %5 : vector<1x128xf32> to vector<8x128xf32>
      %97 = arith.mulf %96, %85 : vector<8x128xf32>
      %98 = arith.addf %95, %97 : vector<8x128xf32>
      %cst_40 = arith.constant 0.000000e+00 : f32
      %99 = vector.broadcast %cst_40 : f32 to vector<8x128xf32>
      %100 = arith.maximumf %98, %99 : vector<8x128xf32>
      %101 = arith.index_cast %89 : i32 to index
      %c0_41 = arith.constant 0 : index
      %102 = vector.load %arg7[%101, %c0_41] : memref<64x128xf32, #tpu.memory_space<vmem>>, vector<8x128xf32>
      tpu.vector_store %arg7[%101, %c0_41], %100 {strides = array<i32>} : memref<64x128xf32, #tpu.memory_space<vmem>>, vector<8x128xf32>,
      %c3_i32 = arith.constant 3 : i32
      %c8_i32_42 = arith.constant 8 : i32
      %103 = arith.muli %c3_i32, %c8_i32_42 : i32
      %104 = tpu.assume_multiple %103, 8 : i32
      %105 = arith.index_cast %104 : i32 to index
      %c0_43 = arith.constant 0 : index
      %106 = vector.load %arg7[%105, %c0_43] : memref<64x128xf32, #tpu.memory_space<vmem>>, vector<8x128xf32>
      %107 = vector.broadcast %48 : vector<1x128xf32> to vector<8x128xf32>
      %108 = arith.mulf %107, %106 : vector<8x128xf32>
      %109 = vector.broadcast %50 : vector<1x128xf32> to vector<8x128xf32>
      %110 = arith.addf %108, %109 : vector<8x128xf32>
      %111 = vector.broadcast %5 : vector<1x128xf32> to vector<8x128xf32>
      %112 = arith.mulf %111, %100 : vector<8x128xf32>
      %113 = arith.addf %110, %112 : vector<8x128xf32>
      %cst_44 = arith.constant 0.000000e+00 : f32
      %114 = vector.broadcast %cst_44 : f32 to vector<8x128xf32>
      %115 = arith.maximumf %113, %114 : vector<8x128xf32>
      %116 = arith.index_cast %104 : i32 to index
      %c0_45 = arith.constant 0 : index
      %117 = vector.load %arg7[%116, %c0_45] : memref<64x128xf32, #tpu.memory_space<vmem>>, vector<8x128xf32>
      tpu.vector_store %arg7[%116, %c0_45], %115 {strides = array<i32>} : memref<64x128xf32, #tpu.memory_space<vmem>>, vector<8x128xf32>,
      %c4_i32 = arith.constant 4 : i32
      %c8_i32_46 = arith.constant 8 : i32
      %118 = arith.muli %c4_i32, %c8_i32_46 : i32
      %119 = tpu.assume_multiple %118, 8 : i32
      %120 = arith.index_cast %119 : i32 to index
      %c0_47 = arith.constant 0 : index
      %121 = vector.load %arg7[%120, %c0_47] : memref<64x128xf32, #tpu.memory_space<vmem>>, vector<8x128xf32>
      %122 = vector.broadcast %48 : vector<1x128xf32> to vector<8x128xf32>
      %123 = arith.mulf %122, %121 : vector<8x128xf32>
      %124 = vector.broadcast %50 : vector<1x128xf32> to vector<8x128xf32>
      %125 = arith.addf %123, %124 : vector<8x128xf32>
      %126 = vector.broadcast %5 : vector<1x128xf32> to vector<8x128xf32>
      %127 = arith.mulf %126, %115 : vector<8x128xf32>
      %128 = arith.addf %125, %127 : vector<8x128xf32>
      %cst_48 = arith.constant 0.000000e+00 : f32
      %129 = vector.broadcast %cst_48 : f32 to vector<8x128xf32>
      %130 = arith.maximumf %128, %129 : vector<8x128xf32>
      %131 = arith.index_cast %119 : i32 to index
      %c0_49 = arith.constant 0 : index
      %132 = vector.load %arg7[%131, %c0_49] : memref<64x128xf32, #tpu.memory_space<vmem>>, vector<8x128xf32>
      tpu.vector_store %arg7[%131, %c0_49], %130 {strides = array<i32>} : memref<64x128xf32, #tpu.memory_space<vmem>>, vector<8x128xf32>,
      %c5_i32 = arith.constant 5 : i32
      %c8_i32_50 = arith.constant 8 : i32
      %133 = arith.muli %c5_i32, %c8_i32_50 : i32
      %134 = tpu.assume_multiple %133, 8 : i32
      %135 = arith.index_cast %134 : i32 to index
      %c0_51 = arith.constant 0 : index
      %136 = vector.load %arg7[%135, %c0_51] : memref<64x128xf32, #tpu.memory_space<vmem>>, vector<8x128xf32>
      %137 = vector.broadcast %48 : vector<1x128xf32> to vector<8x128xf32>
      %138 = arith.mulf %137, %136 : vector<8x128xf32>
      %139 = vector.broadcast %50 : vector<1x128xf32> to vector<8x128xf32>
      %140 = arith.addf %138, %139 : vector<8x128xf32>
      %141 = vector.broadcast %5 : vector<1x128xf32> to vector<8x128xf32>
      %142 = arith.mulf %141, %130 : vector<8x128xf32>
      %143 = arith.addf %140, %142 : vector<8x128xf32>
      %cst_52 = arith.constant 0.000000e+00 : f32
      %144 = vector.broadcast %cst_52 : f32 to vector<8x128xf32>
      %145 = arith.maximumf %143, %144 : vector<8x128xf32>
      %146 = arith.index_cast %134 : i32 to index
      %c0_53 = arith.constant 0 : index
      %147 = vector.load %arg7[%146, %c0_53] : memref<64x128xf32, #tpu.memory_space<vmem>>, vector<8x128xf32>
      tpu.vector_store %arg7[%146, %c0_53], %145 {strides = array<i32>} : memref<64x128xf32, #tpu.memory_space<vmem>>, vector<8x128xf32>,
      %c6_i32 = arith.constant 6 : i32
      %c8_i32_54 = arith.constant 8 : i32
      %148 = arith.muli %c6_i32, %c8_i32_54 : i32
      %149 = tpu.assume_multiple %148, 8 : i32
      %150 = arith.index_cast %149 : i32 to index
      %c0_55 = arith.constant 0 : index
      %151 = vector.load %arg7[%150, %c0_55] : memref<64x128xf32, #tpu.memory_space<vmem>>, vector<8x128xf32>
      %152 = vector.broadcast %48 : vector<1x128xf32> to vector<8x128xf32>
      %153 = arith.mulf %152, %151 : vector<8x128xf32>
      %154 = vector.broadcast %50 : vector<1x128xf32> to vector<8x128xf32>
      %155 = arith.addf %153, %154 : vector<8x128xf32>
      %156 = vector.broadcast %5 : vector<1x128xf32> to vector<8x128xf32>
      %157 = arith.mulf %156, %145 : vector<8x128xf32>
      %158 = arith.addf %155, %157 : vector<8x128xf32>
      %cst_56 = arith.constant 0.000000e+00 : f32
      %159 = vector.broadcast %cst_56 : f32 to vector<8x128xf32>
      %160 = arith.maximumf %158, %159 : vector<8x128xf32>
      %161 = arith.index_cast %149 : i32 to index
      %c0_57 = arith.constant 0 : index
      %162 = vector.load %arg7[%161, %c0_57] : memref<64x128xf32, #tpu.memory_space<vmem>>, vector<8x128xf32>
      tpu.vector_store %arg7[%161, %c0_57], %160 {strides = array<i32>} : memref<64x128xf32, #tpu.memory_space<vmem>>, vector<8x128xf32>,
      %c7_i32 = arith.constant 7 : i32
      %c8_i32_58 = arith.constant 8 : i32
      %163 = arith.muli %c7_i32, %c8_i32_58 : i32
      %164 = tpu.assume_multiple %163, 8 : i32
      %165 = arith.index_cast %164 : i32 to index
      %c0_59 = arith.constant 0 : index
      %166 = vector.load %arg7[%165, %c0_59] : memref<64x128xf32, #tpu.memory_space<vmem>>, vector<8x128xf32>
      %167 = vector.broadcast %48 : vector<1x128xf32> to vector<8x128xf32>
      %168 = arith.mulf %167, %166 : vector<8x128xf32>
      %169 = vector.broadcast %50 : vector<1x128xf32> to vector<8x128xf32>
      %170 = arith.addf %168, %169 : vector<8x128xf32>
      %171 = vector.broadcast %5 : vector<1x128xf32> to vector<8x128xf32>
      %172 = arith.mulf %171, %160 : vector<8x128xf32>
      %173 = arith.addf %170, %172 : vector<8x128xf32>
      %cst_60 = arith.constant 0.000000e+00 : f32
      %174 = vector.broadcast %cst_60 : f32 to vector<8x128xf32>
      %175 = arith.maximumf %173, %174 : vector<8x128xf32>
      %176 = arith.index_cast %164 : i32 to index
      %c0_61 = arith.constant 0 : index
      %177 = vector.load %arg7[%176, %c0_61] : memref<64x128xf32, #tpu.memory_space<vmem>>, vector<8x128xf32>
      tpu.vector_store %arg7[%176, %c0_61], %175 {strides = array<i32>} : memref<64x128xf32, #tpu.memory_space<vmem>>, vector<8x128xf32>,
      %c8_i32_62 = arith.constant 8 : i32
    } else {
    }
    %c1_i32_25 = arith.constant 1 : i32
    %55 = arith.cmpi eq, %arg0, %c1_i32_25 : i32
    %56 = arith.extui %55 : i1 to i32
    %c0_i32_26 = arith.constant 0 : i32
    %57 = arith.cmpi ne, %56, %c0_i32_26 : i32
    scf.if %57 {
      %c0_i32_27 = arith.constant 0 : i32
      %c8_i32_28 = arith.constant 8 : i32
      %58 = arith.muli %c0_i32_27, %c8_i32_28 : i32
      %59 = tpu.assume_multiple %58, 8 : i32
      %60 = arith.index_cast %59 : i32 to index
      %c0_29 = arith.constant 0 : index
      %61 = vector.load %arg7[%60, %c0_29] : memref<64x128xf32, #tpu.memory_space<vmem>>, vector<8x128xf32>
      %62 = vector.broadcast %48 : vector<1x128xf32> to vector<8x128xf32>
      %63 = arith.mulf %62, %61 : vector<8x128xf32>
      %64 = vector.broadcast %50 : vector<1x128xf32> to vector<8x128xf32>
      %65 = arith.addf %63, %64 : vector<8x128xf32>
      %66 = vector.broadcast %5 : vector<1x128xf32> to vector<8x128xf32>
      %67 = arith.mulf %66, %51 : vector<8x128xf32>
      %68 = arith.addf %65, %67 : vector<8x128xf32>
      %cst_30 = arith.constant 0.000000e+00 : f32
      %69 = vector.broadcast %cst_30 : f32 to vector<8x128xf32>
      %70 = arith.maximumf %68, %69 : vector<8x128xf32>
      %c1_i32_31 = arith.constant 1 : i32
      %c8_i32_32 = arith.constant 8 : i32
      %71 = arith.muli %c1_i32_31, %c8_i32_32 : i32
      %72 = tpu.assume_multiple %71, 8 : i32
      %73 = arith.index_cast %72 : i32 to index
      %c0_33 = arith.constant 0 : index
      %74 = vector.load %arg7[%73, %c0_33] : memref<64x128xf32, #tpu.memory_space<vmem>>, vector<8x128xf32>
      %75 = vector.broadcast %48 : vector<1x128xf32> to vector<8x128xf32>
      %76 = arith.mulf %75, %74 : vector<8x128xf32>
      %77 = vector.broadcast %50 : vector<1x128xf32> to vector<8x128xf32>
      %78 = arith.addf %76, %77 : vector<8x128xf32>
      %79 = vector.broadcast %5 : vector<1x128xf32> to vector<8x128xf32>
      %80 = arith.mulf %79, %70 : vector<8x128xf32>
      %81 = arith.addf %78, %80 : vector<8x128xf32>
      %cst_34 = arith.constant 0.000000e+00 : f32
      %82 = vector.broadcast %cst_34 : f32 to vector<8x128xf32>
      %83 = arith.maximumf %81, %82 : vector<8x128xf32>
      %c2_i32_35 = arith.constant 2 : i32
      %c8_i32_36 = arith.constant 8 : i32
      %84 = arith.muli %c2_i32_35, %c8_i32_36 : i32
      %85 = tpu.assume_multiple %84, 8 : i32
      %86 = arith.index_cast %85 : i32 to index
      %c0_37 = arith.constant 0 : index
      %87 = vector.load %arg7[%86, %c0_37] : memref<64x128xf32, #tpu.memory_space<vmem>>, vector<8x128xf32>
      %88 = vector.broadcast %48 : vector<1x128xf32> to vector<8x128xf32>
      %89 = arith.mulf %88, %87 : vector<8x128xf32>
      %90 = vector.broadcast %50 : vector<1x128xf32> to vector<8x128xf32>
      %91 = arith.addf %89, %90 : vector<8x128xf32>
      %92 = vector.broadcast %5 : vector<1x128xf32> to vector<8x128xf32>
      %93 = arith.mulf %92, %83 : vector<8x128xf32>
      %94 = arith.addf %91, %93 : vector<8x128xf32>
      %cst_38 = arith.constant 0.000000e+00 : f32
      %95 = vector.broadcast %cst_38 : f32 to vector<8x128xf32>
      %96 = arith.maximumf %94, %95 : vector<8x128xf32>
      %c3_i32 = arith.constant 3 : i32
      %c8_i32_39 = arith.constant 8 : i32
      %97 = arith.muli %c3_i32, %c8_i32_39 : i32
      %98 = tpu.assume_multiple %97, 8 : i32
      %99 = arith.index_cast %98 : i32 to index
      %c0_40 = arith.constant 0 : index
      %100 = vector.load %arg7[%99, %c0_40] : memref<64x128xf32, #tpu.memory_space<vmem>>, vector<8x128xf32>
      %101 = vector.broadcast %48 : vector<1x128xf32> to vector<8x128xf32>
      %102 = arith.mulf %101, %100 : vector<8x128xf32>
      %103 = vector.broadcast %50 : vector<1x128xf32> to vector<8x128xf32>
      %104 = arith.addf %102, %103 : vector<8x128xf32>
      %105 = vector.broadcast %5 : vector<1x128xf32> to vector<8x128xf32>
      %106 = arith.mulf %105, %96 : vector<8x128xf32>
      %107 = arith.addf %104, %106 : vector<8x128xf32>
      %cst_41 = arith.constant 0.000000e+00 : f32
      %108 = vector.broadcast %cst_41 : f32 to vector<8x128xf32>
      %109 = arith.maximumf %107, %108 : vector<8x128xf32>
      %c4_i32 = arith.constant 4 : i32
      %c8_i32_42 = arith.constant 8 : i32
      %110 = arith.muli %c4_i32, %c8_i32_42 : i32
      %111 = tpu.assume_multiple %110, 8 : i32
      %112 = arith.index_cast %111 : i32 to index
      %c0_43 = arith.constant 0 : index
      %113 = vector.load %arg7[%112, %c0_43] : memref<64x128xf32, #tpu.memory_space<vmem>>, vector<8x128xf32>
      %114 = vector.broadcast %48 : vector<1x128xf32> to vector<8x128xf32>
      %115 = arith.mulf %114, %113 : vector<8x128xf32>
      %116 = vector.broadcast %50 : vector<1x128xf32> to vector<8x128xf32>
      %117 = arith.addf %115, %116 : vector<8x128xf32>
      %118 = vector.broadcast %5 : vector<1x128xf32> to vector<8x128xf32>
      %119 = arith.mulf %118, %109 : vector<8x128xf32>
      %120 = arith.addf %117, %119 : vector<8x128xf32>
      %cst_44 = arith.constant 0.000000e+00 : f32
      %121 = vector.broadcast %cst_44 : f32 to vector<8x128xf32>
      %122 = arith.maximumf %120, %121 : vector<8x128xf32>
      %c5_i32 = arith.constant 5 : i32
      %c8_i32_45 = arith.constant 8 : i32
      %123 = arith.muli %c5_i32, %c8_i32_45 : i32
      %124 = tpu.assume_multiple %123, 8 : i32
      %125 = arith.index_cast %124 : i32 to index
      %c0_46 = arith.constant 0 : index
      %126 = vector.load %arg7[%125, %c0_46] : memref<64x128xf32, #tpu.memory_space<vmem>>, vector<8x128xf32>
      %127 = vector.broadcast %48 : vector<1x128xf32> to vector<8x128xf32>
      %128 = arith.mulf %127, %126 : vector<8x128xf32>
      %129 = vector.broadcast %50 : vector<1x128xf32> to vector<8x128xf32>
      %130 = arith.addf %128, %129 : vector<8x128xf32>
      %131 = vector.broadcast %5 : vector<1x128xf32> to vector<8x128xf32>
      %132 = arith.mulf %131, %122 : vector<8x128xf32>
      %133 = arith.addf %130, %132 : vector<8x128xf32>
      %cst_47 = arith.constant 0.000000e+00 : f32
      %134 = vector.broadcast %cst_47 : f32 to vector<8x128xf32>
      %135 = arith.maximumf %133, %134 : vector<8x128xf32>
      %c6_i32 = arith.constant 6 : i32
      %c8_i32_48 = arith.constant 8 : i32
      %136 = arith.muli %c6_i32, %c8_i32_48 : i32
      %137 = tpu.assume_multiple %136, 8 : i32
      %138 = arith.index_cast %137 : i32 to index
      %c0_49 = arith.constant 0 : index
      %139 = vector.load %arg7[%138, %c0_49] : memref<64x128xf32, #tpu.memory_space<vmem>>, vector<8x128xf32>
      %140 = vector.broadcast %48 : vector<1x128xf32> to vector<8x128xf32>
      %141 = arith.mulf %140, %139 : vector<8x128xf32>
      %142 = vector.broadcast %50 : vector<1x128xf32> to vector<8x128xf32>
      %143 = arith.addf %141, %142 : vector<8x128xf32>
      %144 = vector.broadcast %5 : vector<1x128xf32> to vector<8x128xf32>
      %145 = arith.mulf %144, %135 : vector<8x128xf32>
      %146 = arith.addf %143, %145 : vector<8x128xf32>
      %cst_50 = arith.constant 0.000000e+00 : f32
      %147 = vector.broadcast %cst_50 : f32 to vector<8x128xf32>
      %148 = arith.maximumf %146, %147 : vector<8x128xf32>
      %c7_i32 = arith.constant 7 : i32
      %c8_i32_51 = arith.constant 8 : i32
      %149 = arith.muli %c7_i32, %c8_i32_51 : i32
      %150 = tpu.assume_multiple %149, 8 : i32
      %151 = arith.index_cast %150 : i32 to index
      %c0_52 = arith.constant 0 : index
      %152 = vector.load %arg7[%151, %c0_52] : memref<64x128xf32, #tpu.memory_space<vmem>>, vector<8x128xf32>
      %153 = vector.broadcast %48 : vector<1x128xf32> to vector<8x128xf32>
      %154 = arith.mulf %153, %152 : vector<8x128xf32>
      %155 = vector.broadcast %50 : vector<1x128xf32> to vector<8x128xf32>
      %156 = arith.addf %154, %155 : vector<8x128xf32>
      %157 = vector.broadcast %5 : vector<1x128xf32> to vector<8x128xf32>
      %158 = arith.mulf %157, %148 : vector<8x128xf32>
      %159 = arith.addf %156, %158 : vector<8x128xf32>
      %cst_53 = arith.constant 0.000000e+00 : f32
      %160 = vector.broadcast %cst_53 : f32 to vector<8x128xf32>
      %161 = arith.maximumf %159, %160 : vector<8x128xf32>
      %c8_i32_54 = arith.constant 8 : i32
      %c0_55 = arith.constant 0 : index
      %c0_56 = arith.constant 0 : index
      %162 = vector.load %arg4[%c0_55, %c0_56] : memref<128x128xf32, #tpu.memory_space<vmem>>, vector<128x128xf32>
      %cst_57 = arith.constant dense<0.000000e+00> : vector<8x128xf32>
      %163 = tpu.matmul %161, %162, %cst_57 {dimension_numbers = #tpu.dot_dimension_numbers<[1], [0], [0], [1], [0, 0, 1, 1], [], []>} : vector<8x128xf32>, vector<128x128xf32>, vector<8x128xf32> -> vector<8x128xf32>
      %c0_58 = arith.constant 0 : index
      %c0_59 = arith.constant 0 : index
      %164 = vector.load %arg5[%c0_58, %c0_59] : memref<1x128xf32, #tpu.memory_space<vmem>>, vector<1x128xf32>
      %165 = vector.broadcast %164 : vector<1x128xf32> to vector<8x128xf32>
      %166 = arith.addf %163, %165 : vector<8x128xf32>
      %c0_60 = arith.constant 0 : index
      %c0_61 = arith.constant 0 : index
      %167 = vector.load %arg6[%c0_60, %c0_61] : memref<8x128xf32, #tpu.memory_space<vmem>>, vector<8x128xf32>
      tpu.vector_store %arg6[%c0_60, %c0_61], %166 {strides = array<i32>} : memref<8x128xf32, #tpu.memory_space<vmem>>, vector<8x128xf32>,
    } else {
    }
    return
  }
  func.func @transform_1(%arg0: i32) -> (i32, i32, i32) {
    %c0_i32 = arith.constant 0 : i32
    %c0_i32_0 = arith.constant 0 : i32
    %c0_i32_1 = arith.constant 0 : i32
    return %arg0, %c0_i32, %c0_i32_0 : i32, i32, i32
  }
  func.func @transform_2(%arg0: i32) -> (i32, i32, i32) {
    %c0_i32 = arith.constant 0 : i32
    %c0_i32_0 = arith.constant 0 : i32
    %c0_i32_1 = arith.constant 0 : i32
    return %arg0, %c0_i32, %c0_i32_0 : i32, i32, i32
  }
  func.func @transform_3(%arg0: i32) -> (i32, i32) {
    %c0_i32 = arith.constant 0 : i32
    %c0_i32_0 = arith.constant 0 : i32
    %c0_i32_1 = arith.constant 0 : i32
    return %c0_i32, %c0_i32_0 : i32, i32
  }
  func.func @transform_4(%arg0: i32) -> (i32, i32) {
    %c0_i32 = arith.constant 0 : i32
    %c0_i32_0 = arith.constant 0 : i32
    %c0_i32_1 = arith.constant 0 : i32
    return %c0_i32, %c0_i32_0 : i32, i32
  }
  func.func @transform_5(%arg0: i32) -> (i32, i32) {
    %c0_i32 = arith.constant 0 : i32
    %c0_i32_0 = arith.constant 0 : i32
    %c0_i32_1 = arith.constant 0 : i32
    return %c0_i32, %c0_i32_0 : i32, i32
  }
}

</mosaic_0001>

<llo_original>
// kernel: tpu_custom_call.1
$region0: #{tpu_custom_call.1}
  #allocation0 [shape = 'u32[]', space=smem, size = 0x4, offset = 0x4, fixed_abs, tag = 'smem constant byte address 0x4 - core index']
  #allocation1 [shape = 'u32[144,128]{1,0:T(1,128)}', space=vmem, size = 0x12000, scoped, tag = 'internal scratch']
  #allocation2 [shape = 'f32[64,128]{1,0:T(8,128)}', space=vmem, size = 0x8000, scoped, tag = 'scratch operand']
  #allocation3 [shape = 'f32[2,64,128]{2,1,0:T(8,128)}', space=vmem, size = 0x10000, scoped, tag = 'scratch operand']
  #allocation4 [shape = 's32[2]{0}', space=sflag, size = 0x8, scoped, tag = 'scratch operand']
  #allocation5 [shape = 'f32[1,128]{1,0:T(1,128)}', space=vmem, size = 0x200, scoped, tag = 'scratch operand']
  #allocation6 [shape = 'f32[1,128]{1,0:T(1,128)}', space=vmem, size = 0x200, scoped, tag = 'scratch operand']
  #allocation14 [shape = 's32[]', space=sflag, size = 0x4, offset = 0, fixed_abs, tag = 'sflag constant byte address 0x0 - dummy sync flag']
  #allocation15 [shape = 's32[]', space=sflag, size = 0x4, offset = 0, fixed_abs, tag = 'sflag constant byte address 0x0 - dummy sync flag']
  #allocation16 [shape = 'u32[]', space=smem, size = 0x4, offset = 0x44, fixed_abs, tag = 'smem constant byte address 0x44 - assertion arg 0']
  #allocation17 [shape = 'u32[]', space=smem, size = 0x4, offset = 0x48, fixed_abs, tag = 'smem constant byte address 0x48 - assertion arg 1']
  %s0 = inlined_call_operand.hbm [shape: f32[64,128], index: 0, kind: input, shape index: {}]
  %s1 = inlined_call_operand.hbm [shape: f32[2,128,128], index: 1, kind: input, shape index: {}]
  %s2 = inlined_call_operand.hbm [shape: f32[2,8,128], index: 2, kind: input, shape index: {}]
  %s3 = inlined_call_operand.hbm [shape: f32[128,128], index: 3, kind: input, shape index: {}]
  %s4 = inlined_call_operand.vmem [shape: f32[1,128], index: 4, kind: input, shape index: {}]
  %s5 = inlined_call_operand.hbm [shape: f32[8,128], index: 5, kind: output, shape index: {}]
  %s6 = sld [smem:[#allocation0]]
  $region81: #{tpu_custom_call.1} parent=0
    _
  %s8 = ssub.s32 1, %s6
  %s9 = scalar_select 0, %s8, %s6
  $region1: #{tpu_custom_call.1} parent=0
    #allocation7 [shape = 'u8[131072]{0}', space=vmem, size = 0x20000, scoped, tag = 'input window, operand 1']
    #allocation8 [shape = 's32[2]{0}', space=sflag, size = 0x8, scoped, tag = 'scoped memory for tpu_custom_call.1']
    #allocation9 [shape = 's32[2]{0}', space=sflag, size = 0x8, scoped, tag = 'scoped memory for tpu_custom_call.1']
    #allocation10 [shape = 'u8[8192]{0}', space=vmem, size = 0x2000, scoped, tag = 'input window, operand 2']
    #allocation11 [shape = 's32[2]{0}', space=sflag, size = 0x8, scoped, tag = 'scoped memory for tpu_custom_call.1']
    #allocation12 [shape = 'u8[65536]{0}', space=vmem, size = 0x10000, scoped, tag = 'input window, operand 3, single buffered']
    #allocation13 [shape = 'u8[4096]{0}', space=vmem, size = 0x1000, scoped, tag = 'output window, operand 0, single buffered']
    %10 = vsyncpa [#allocation8], 0
    %s11 = scalar_lea.sflag [#allocation8], 1
    %12 = vsyncpa %s11, 0
    %13 = vsyncpa [#allocation11], 0
    %s14 = scalar_lea.sflag [#allocation11], 1
    %15 = vsyncpa %s14, 0
    %16 = vsyncpa [#allocation9], 0
    loop: start=0, step=1, limit=4
    $region2: #{tpu_custom_call.1} parent=1 // loop_pre_header
      _
    $region3: #{tpu_custom_call.1} parent=1 // loop_header
      %s18 = sphi 0, %s22
      %p19 = scmp.ge.s32.totalorder %s18, 4
      %s28 = sphi 0, %s30
      %s31 = sphi 0, %s28
      %s32 = sphi 0, %s31
      %s48 = sphi 0, %s32
      %s54 = sphi 0, %s56
      %s57 = sphi 0, %s54
      %s58 = sphi 0, %s57
      %s74 = sphi 0, %s58
      %s78 = sphi 0, %s78
      %s80 = sphi 0, %s78
      %s81 = sphi 0, %s80
      %s95 = sphi 0, %s81
      %s99 = sphi 0, %s99
      %s101 = sphi 0, %s99
      %s102 = sphi 0, %s101
      %s116 = sphi 0, %s102
      %s120 = sphi 0, %s120
      %s122 = sphi 0, %s120
      %s123 = sphi 0, %s122
      %s137 = sphi 0, %s123
    $region4: #{tpu_custom_call.1} parent=1 // loop_header_branch
      %21 = sbr.rel (%p19) target = $region8
    $region5: #{tpu_custom_call.1} parent=1 // loop_body
      %s23 = ssub.s32 %s18, 1
      %s24 = ssub.s32 %s18, 2
      %s25 = sadd.s32 %s18, 1
      %s26 = ssub.s32 %s18, %s25
      %p27 = scmp.eq.s32.totalorder %s26, 0
      %s29 = sadd.s32 %s28, 1
      %s30 = scalar_select %p27, %s28, %s29
      %p33 = pneg %p27
      %p34 = scmp.eq.s32.totalorder %s18, 1
      %p35 = por %p33, %p34
      %p36 = scmp.ne.s32.totalorder %s28, %s31
      %p37 = scmp.eq.s32.totalorder %s18, 0
      %p38 = por %p36, %p37
      %p39 = scmp.ne.s32.totalorder %s28, %s31
      %p40 = scmp.eq.s32.totalorder %s23, 1
      %p41 = por %p39, %p40
      %p42 = scmp.ne.s32.totalorder %s31, %s32
      %p43 = scmp.eq.s32.totalorder %s23, 0
      %p44 = por %p42, %p43
      %p45 = scmp.ne.s32.totalorder %s31, %s32
      %p46 = scmp.eq.s32.totalorder %s24, 1
      %p47 = por %p45, %p46
      %p49 = scmp.ne.s32.totalorder %s32, %s48
      %p50 = scmp.eq.s32.totalorder %s24, 0
      %p51 = por %p49, %p50
      %s52 = ssub.s32 %s18, %s25
      %p53 = scmp.eq.s32.totalorder %s52, 0
      %s55 = sadd.s32 %s54, 1
      %s56 = scalar_select %p53, %s54, %s55
      %p59 = pneg %p53
      %p60 = scmp.eq.s32.totalorder %s18, 1
      %p61 = por %p59, %p60
      %p62 = scmp.ne.s32.totalorder %s54, %s57
      %p63 = scmp.eq.s32.totalorder %s18, 0
      %p64 = por %p62, %p63
      %p65 = scmp.ne.s32.totalorder %s54, %s57
      %p66 = scmp.eq.s32.totalorder %s23, 1
      %p67 = por %p65, %p66
      %p68 = scmp.ne.s32.totalorder %s57, %s58
      %p69 = scmp.eq.s32.totalorder %s23, 0
      %p70 = por %p68, %p69
      %p71 = scmp.ne.s32.totalorder %s57, %s58
      %p72 = scmp.eq.s32.totalorder %s24, 1
      %p73 = por %p71, %p72
      %p75 = scmp.ne.s32.totalorder %s58, %s74
      %p76 = scmp.eq.s32.totalorder %s24, 0
      %p77 = por %p75, %p76
      %s79 = sadd.s32 %s78, 1
      %p82 = scmp.eq.s32.totalorder %s18, 1
      %p83 = scmp.ne.s32.totalorder %s78, %s80
      %p84 = scmp.eq.s32.totalorder %s18, 0
      %p85 = por %p83, %p84
      %p86 = scmp.ne.s32.totalorder %s78, %s80
      %p87 = scmp.eq.s32.totalorder %s23, 1
      %p88 = por %p86, %p87
      %p89 = scmp.ne.s32.totalorder %s80, %s81
      %p90 = scmp.eq.s32.totalorder %s23, 0
      %p91 = por %p89, %p90
      %p92 = scmp.ne.s32.totalorder %s80, %s81
      %p93 = scmp.eq.s32.totalorder %s24, 1
      %p94 = por %p92, %p93
      %p96 = scmp.ne.s32.totalorder %s81, %s95
      %p97 = scmp.eq.s32.totalorder %s24, 0
      %p98 = por %p96, %p97
      %s100 = sadd.s32 %s99, 1
      %p103 = scmp.eq.s32.totalorder %s18, 1
      %p104 = scmp.ne.s32.totalorder %s99, %s101
      %p105 = scmp.eq.s32.totalorder %s18, 0
      %p106 = por %p104, %p105
      %p107 = scmp.ne.s32.totalorder %s99, %s101
      %p108 = scmp.eq.s32.totalorder %s23, 1
      %p109 = por %p107, %p108
      %p110 = scmp.ne.s32.totalorder %s101, %s102
      %p111 = scmp.eq.s32.totalorder %s23, 0
      %p112 = por %p110, %p111
      %p113 = scmp.ne.s32.totalorder %s101, %s102
      %p114 = scmp.eq.s32.totalorder %s24, 1
      %p115 = por %p113, %p114
      %p117 = scmp.ne.s32.totalorder %s102, %s116
      %p118 = scmp.eq.s32.totalorder %s24, 0
      %p119 = por %p117, %p118
      %s121 = sadd.s32 %s120, 1
      %p124 = scmp.eq.s32.totalorder %s18, 1
      %p125 = scmp.ne.s32.totalorder %s120, %s122
      %p126 = scmp.eq.s32.totalorder %s18, 0
      %p127 = por %p125, %p126
      %p128 = scmp.ne.s32.totalorder %s120, %s122
      %p129 = scmp.eq.s32.totalorder %s23, 1
      %p130 = por %p128, %p129
      %p131 = scmp.ne.s32.totalorder %s122, %s123
      %p132 = scmp.eq.s32.totalorder %s23, 0
      %p133 = por %p131, %p132
      %p134 = scmp.ne.s32.totalorder %s122, %s123
      %p135 = scmp.eq.s32.totalorder %s24, 1
      %p136 = por %p134, %p135
      %p138 = scmp.ne.s32.totalorder %s123, %s137
      %p139 = scmp.eq.s32.totalorder %s24, 0
      %p140 = por %p138, %p139
      %p141 = scmp.le.s32.totalorder 1, %s18
      %p142 = scmp.lt.s32.totalorder %s18, 3
      %p143 = pnand %p141, %p142
      %p144 = pneg %p143
      // Predicated region
      $region9: #{tpu_custom_call.1} parent=5 // pred_check
        _
      $region10: #{tpu_custom_call.1} parent=5 // pred_check_branch
        %146 = sbr.rel (%p143) target = $region12
      $region11: #{tpu_custom_call.1} parent=5 // pred_region
        %s147 = ssub.s32 %s18, 1
        // Predicated region
        $region13: #{tpu_custom_call.1} parent=11 // pred_check
          %p148 = pneg %p91
        $region14: #{tpu_custom_call.1} parent=11 // pred_check_branch
          %150 = sbr.rel (%p148) target = $region16
        $region15: #{tpu_custom_call.1} parent=11 // pred_region
          %s152 = ssub.s32 2048, 2048
          %153 = vsyncadd [#allocation11], %s152
          %s154 = sshll.u32 [#allocation12], 4
          %s155 = int_to_ptr.vmem [resolvable:$true] %s154
          %160 = dma.hbm_to_vmem [thread:$0]  %s3, 2048, %s155, [#allocation11], 128, 128, 8
        $region16: #{tpu_custom_call.1} parent=11 // pred_fallthru
          _
        // Predicated region
        $region17: #{tpu_custom_call.1} parent=11 // pred_check
          %p161 = pneg %p112
        $region18: #{tpu_custom_call.1} parent=11 // pred_check_branch
          %163 = sbr.rel (%p161) target = $region20
        $region19: #{tpu_custom_call.1} parent=11 // pred_region
          _
        $region20: #{tpu_custom_call.1} parent=11 // pred_fallthru
          _
      $region12: #{tpu_custom_call.1} parent=5 // pred_fallthru
        _
      %p164 = scmp.lt.s32.totalorder %s18, 2
      // Predicated region
      $region21: #{tpu_custom_call.1} parent=5 // pred_check
        %p165 = pneg %p164
      $region22: #{tpu_custom_call.1} parent=5 // pred_check_branch
        %167 = sbr.rel (%p165) target = $region24
      $region23: #{tpu_custom_call.1} parent=5 // pred_region
        // Predicated region
        $region25: #{tpu_custom_call.1} parent=23 // pred_check
          %p168 = pneg %p38
        $region26: #{tpu_custom_call.1} parent=23 // pred_check_branch
          %170 = sbr.rel (%p168) target = $region28
        $region27: #{tpu_custom_call.1} parent=23 // pred_region
          %s171 = sand.u32 %s28, 1
          %s172 = scalar_lea.sflag [#allocation8], %s171
          %s173 = sand.u32 %s28, 1
          %s174 = smul.addr %s173, 128
          %s175 = scalar_lea.vmem [#allocation7], %s174
          %s177 = ssub.s32 2048, 2048
          %178 = vsyncadd %s172, %s177
          %s179 = smul.addr %s18, 16
          %s180 = smul.addr %s179, 128
          %s181 = scalar_lea.hbm %s1, %s180
          %s182 = sshll.u32 %s175, 4
          %s183 = int_to_ptr.vmem [resolvable:$true] %s182
          %188 = dma.hbm_to_vmem [thread:$0]  %s181, 2048, %s183, %s172, 128, 128, 8
        $region28: #{tpu_custom_call.1} parent=23 // pred_fallthru
          _
        // Predicated region
        $region29: #{tpu_custom_call.1} parent=23 // pred_check
          %p189 = pneg %p64
        $region30: #{tpu_custom_call.1} parent=23 // pred_check_branch
          %191 = sbr.rel (%p189) target = $region32
        $region31: #{tpu_custom_call.1} parent=23 // pred_region
          %s192 = sand.u32 %s18, 1
          %s193 = scalar_lea.sflag [#allocation11], %s192
          %s194 = sand.u32 %s54, 1
          %s195 = smul.addr %s194, 8
          %s196 = scalar_lea.vmem [#allocation10], %s195
          %s198 = ssub.s32 128, 128
          %199 = vsyncadd %s193, %s198
          %s200 = smul.addr %s18, 128
          %s201 = scalar_lea.hbm %s2, %s200
          %s203 = sshll.u32 %s196, 4
          %s204 = int_to_ptr.vmem [resolvable:$true] %s203
          %206 = dma.hbm_to_vmem [thread:$0]  %s201, 128, %s204, %s193
        $region32: #{tpu_custom_call.1} parent=23 // pred_fallthru
          _
      $region24: #{tpu_custom_call.1} parent=5 // pred_fallthru
        _
      %p207 = scmp.le.s32.totalorder 1, %s18
      %p208 = scmp.lt.s32.totalorder %s18, 3
      %p209 = pnand %p207, %p208
      %p210 = pneg %p209
      // Predicated region
      $region33: #{tpu_custom_call.1} parent=5 // pred_check
        _
      $region34: #{tpu_custom_call.1} parent=5 // pred_check_branch
        %212 = sbr.rel (%p209) target = $region36
      $region35: #{tpu_custom_call.1} parent=5 // pred_region
        %s213 = ssub.s32 %s18, 1
        %s214 = sand.u32 %s31, 1
        %s215 = scalar_lea.sflag [#allocation8], %s214
        %s216 = sand.u32 %s31, 1
        %s217 = smul.addr %s216, 128
        %s218 = scalar_lea.vmem [#allocation7], %s217
        // Predicated region
        $region37: #{tpu_custom_call.1} parent=35 // pred_check
          %p219 = pneg %p44
        $region38: #{tpu_custom_call.1} parent=35 // pred_check_branch
          %221 = sbr.rel (%p219) target = $region40
        $region39: #{tpu_custom_call.1} parent=35 // pred_region
          %222 = dma.done %s215, 2048
        $region40: #{tpu_custom_call.1} parent=35 // pred_fallthru
          _
        %s223 = sand.u32 %s23, 1
        %s224 = scalar_lea.sflag [#allocation11], %s223
        %s225 = sand.u32 %s57, 1
        %s226 = smul.addr %s225, 8
        %s227 = scalar_lea.vmem [#allocation10], %s226
        // Predicated region
        $region41: #{tpu_custom_call.1} parent=35 // pred_check
          %p228 = pneg %p70
        $region42: #{tpu_custom_call.1} parent=35 // pred_check_branch
          %230 = sbr.rel (%p228) target = $region44
        $region43: #{tpu_custom_call.1} parent=35 // pred_region
          %231 = dma.done %s224, 128
        $region44: #{tpu_custom_call.1} parent=35 // pred_fallthru
          _
        // Predicated region
        $region45: #{tpu_custom_call.1} parent=35 // pred_check
          %p232 = pneg %p91
        $region46: #{tpu_custom_call.1} parent=35 // pred_check_branch
          %234 = sbr.rel (%p232) target = $region48
        $region47: #{tpu_custom_call.1} parent=35 // pred_region
          %235 = dma.done [#allocation11], 2048
        $region48: #{tpu_custom_call.1} parent=35 // pred_fallthru
          _
        %s236 = sand.u32 %s31, 1
        %s237 = scalar_lea.sflag [#allocation8], %s236
        %s238 = sand.u32 %s31, 1
        %s239 = smul.addr %s238, 128
        %s240 = scalar_lea.vmem [#allocation7], %s239
        %p241 = pneg %p44
        %p242 = pneg %p41
        %s243 = sand.u32 %s23, 1
        %s244 = scalar_lea.sflag [#allocation11], %s243
        %s245 = sand.u32 %s57, 1
        %s246 = smul.addr %s245, 8
        %s247 = scalar_lea.vmem [#allocation10], %s246
        %p248 = pneg %p70
        %p249 = pneg %p67
        %p250 = pneg %p91
        %p251 = pneg %p88
        %p252 = pneg %p112
        %p253 = pneg %p109
        %p254 = pneg %p133
        %p255 = pneg %p130
        %v256 = vld [vmem:[%s227] sm:$0xff]
        %257 = vst [vmem:[#allocation5] sm:$0x1] 0.0
        %258 = vst [vmem:[#allocation6] sm:$0x1] 0.0
        %v259 = vlaneseq
        %v260 = vshrl.u32 %v259, 7
        %v261 = vadd.s32 %v260, 8
        %v262 = vadd.s32 %v260, 16
        %v263 = vadd.s32 %v260, 24
        %v264 = vadd.s32 %v260, 32
        %v265 = vadd.s32 %v260, 40
        %v266 = vadd.s32 %v260, 48
        %v267 = vadd.s32 %v260, 56
        %vm268 = vcmp.lt.s32.totalorder %v260, 0
        %v269 = vsub.s32 0, %v260
        %v270 = vsel %vm268, %v269, %v260
        %v271 = vshrl.u32 %v270, 3
        %v272 = vand.u32 %v270, 7
        %v273 = vsub.s32 0, %v272
        %v274 = vsel %vm268, %v273, %v272
        %vm275 = vcmp.lt.s32.totalorder %v261, 0
        %v276 = vsub.s32 0, %v261
        %v277 = vsel %vm275, %v276, %v261
        %v278 = vshrl.u32 %v277, 3
        %v279 = vand.u32 %v277, 7
        %v280 = vsub.s32 0, %v279
        %v281 = vsel %vm275, %v280, %v279
        %vm282 = vcmp.lt.s32.totalorder %v262, 0
        %v283 = vsub.s32 0, %v262
        %v284 = vsel %vm282, %v283, %v262
        %v285 = vshrl.u32 %v284, 3
        %v286 = vand.u32 %v284, 7
        %v287 = vsub.s32 0, %v286
        %v288 = vsel %vm282, %v287, %v286
        %vm289 = vcmp.lt.s32.totalorder %v263, 0
        %v290 = vsub.s32 0, %v263
        %v291 = vsel %vm289, %v290, %v263
        %v292 = vshrl.u32 %v291, 3
        %v293 = vand.u32 %v291, 7
        %v294 = vsub.s32 0, %v293
        %v295 = vsel %vm289, %v294, %v293
        %vm296 = vcmp.lt.s32.totalorder %v264, 0
        %v297 = vsub.s32 0, %v264
        %v298 = vsel %vm296, %v297, %v264
        %v299 = vshrl.u32 %v298, 3
        %v300 = vand.u32 %v298, 7
        %v301 = vsub.s32 0, %v300
        %v302 = vsel %vm296, %v301, %v300
        %vm303 = vcmp.lt.s32.totalorder %v265, 0
        %v304 = vsub.s32 0, %v265
        %v305 = vsel %vm303, %v304, %v265
        %v306 = vshrl.u32 %v305, 3
        %v307 = vand.u32 %v305, 7
        %v308 = vsub.s32 0, %v307
        %v309 = vsel %vm303, %v308, %v307
        %vm310 = vcmp.lt.s32.totalorder %v266, 0
        %v311 = vsub.s32 0, %v266
        %v312 = vsel %vm310, %v311, %v266
        %v313 = vshrl.u32 %v312, 3
        %v314 = vand.u32 %v312, 7
        %v315 = vsub.s32 0, %v314
        %v316 = vsel %vm310, %v315, %v314
        %vm317 = vcmp.lt.s32.totalorder %v267, 0
        %v318 = vsub.s32 0, %v267
        %v319 = vsel %vm317, %v318, %v267
        %v320 = vshrl.u32 %v319, 3
        %v321 = vand.u32 %v319, 7
        %v322 = vsub.s32 0, %v321
        %v323 = vsel %vm317, %v322, %v321
        %vm324 = vcmp.ne.s32.totalorder %v274, 0
        %vm325 = vcmp.ne.s32.totalorder %v281, 0
        %vm326 = vcmp.ne.s32.totalorder %v288, 0
        %vm327 = vcmp.ne.s32.totalorder %v295, 0
        %vm328 = vcmp.ne.s32.totalorder %v302, 0
        %vm329 = vcmp.ne.s32.totalorder %v309, 0
        %vm330 = vcmp.ne.s32.totalorder %v316, 0
        %vm331 = vcmp.ne.s32.totalorder %v323, 0
        %vm332 = vcmp.lt.s32.totalorder %v274, 0
        %vm333 = vcmp.lt.s32.totalorder %v281, 0
        %vm334 = vcmp.lt.s32.totalorder %v288, 0
        %vm335 = vcmp.lt.s32.totalorder %v295, 0
        %vm336 = vcmp.lt.s32.totalorder %v302, 0
        %vm337 = vcmp.lt.s32.totalorder %v309, 0
        %vm338 = vcmp.lt.s32.totalorder %v316, 0
        %vm339 = vcmp.lt.s32.totalorder %v323, 0
        %vm340 = vmand %vm332, %vm324
        %vm341 = vmand %vm333, %vm325
        %vm342 = vmand %vm334, %vm326
        %vm343 = vmand %vm335, %vm327
        %vm344 = vmand %vm336, %vm328
        %vm345 = vmand %vm337, %vm329
        %vm346 = vmand %vm338, %vm330
        %vm347 = vmand %vm339, %vm331
        %v348 = vadd.s32 %v274, 8
        %v349 = vadd.s32 %v281, 8
        %v350 = vadd.s32 %v288, 8
        %v351 = vadd.s32 %v295, 8
        %v352 = vadd.s32 %v302, 8
        %v353 = vadd.s32 %v309, 8
        %v354 = vadd.s32 %v316, 8
        %v355 = vadd.s32 %v323, 8
        %v356 = vsel %vm340, %v348, %v274
        %v357 = vsel %vm341, %v349, %v281
        %v358 = vsel %vm342, %v350, %v288
        %v359 = vsel %vm343, %v351, %v295
        %v360 = vsel %vm344, %v352, %v302
        %v361 = vsel %vm345, %v353, %v309
        %v362 = vsel %vm346, %v354, %v316
        %v363 = vsel %vm347, %v355, %v323
        %vm364 = vcmp.lt.s32.totalorder %v356, 2
        %vm365 = vcmp.lt.s32.totalorder %v357, 2
        %vm366 = vcmp.lt.s32.totalorder %v358, 2
        %vm367 = vcmp.lt.s32.totalorder %v359, 2
        %vm368 = vcmp.lt.s32.totalorder %v360, 2
        %vm369 = vcmp.lt.s32.totalorder %v361, 2
        %vm370 = vcmp.lt.s32.totalorder %v362, 2
        %vm371 = vcmp.lt.s32.totalorder %v363, 2
        %p372 = scmp.eq.s32.totalorder %s23, 0
        // Predicated region
        $region49: #{tpu_custom_call.1} parent=35 // pred_check
          %p373 = pneg %p372
        $region50: #{tpu_custom_call.1} parent=35 // pred_check_branch
          %375 = sbr.rel (%p373) target = $region52
        $region51: #{tpu_custom_call.1} parent=35 // pred_region
          %v376 = vld [vmem:[%s218] sm:$0xff]
          %v377 = vld [vmem:[%s218 + $0x8] sm:$0xff]
          %v378 = vld [vmem:[%s218 + $0x10] sm:$0xff]
          %v379 = vld [vmem:[%s218 + $0x18] sm:$0xff]
          %v380 = vld [vmem:[%s218 + $0x20] sm:$0xff]
          %v381 = vld [vmem:[%s218 + $0x28] sm:$0xff]
          %v382 = vld [vmem:[%s218 + $0x30] sm:$0xff]
          %v383 = vld [vmem:[%s218 + $0x38] sm:$0xff]
          %v384 = vld [vmem:[%s218 + $0x40] sm:$0xff]
          %v385 = vld [vmem:[%s218 + $0x48] sm:$0xff]
          %v386 = vld [vmem:[%s218 + $0x50] sm:$0xff]
          %v387 = vld [vmem:[%s218 + $0x58] sm:$0xff]
          %v388 = vld [vmem:[%s218 + $0x60] sm:$0xff]
          %v389 = vld [vmem:[%s218 + $0x68] sm:$0xff]
          %v390 = vld [vmem:[%s218 + $0x70] sm:$0xff]
          %v391 = vld [vmem:[%s218 + $0x78] sm:$0xff]
          // Predicated region
          $region53: #{tpu_custom_call.1} parent=51 // pred_check
            _
          $region54: #{tpu_custom_call.1} parent=51 // pred_check_branch
            %393 = sbr.rel target = $region56
          $region55: #{tpu_custom_call.1} parent=51 // pred_region
            %394 = sst [smem:[#allocation16]] [#allocation15]
            %395 = sst [smem:[#allocation17]] [#allocation14]
          $region56: #{tpu_custom_call.1} parent=51 // pred_fallthru
            _
          %397 = shalt.err (0)
          %s399 = sshll.u32 [#allocation3], 4
          %s400 = int_to_ptr.vmem [resolvable:$true] %s399
          %402 = dma.hbm_to_vmem [thread:$0]  %s0, 1024, %s400, [#allocation4]
          %s403 = smul.u32 64, 1
          %s404 = sshll.u32 %s403, 4
          %405 = dma.done [#allocation4], %s404
          %v406 = vld [vmem:[#allocation3] sm:$0xff]
          %v407 = vld [vmem:[#allocation3 + $0x8] sm:$0xff]
          %v408 = vld [vmem:[#allocation3 + $0x10] sm:$0xff]
          %v409 = vld [vmem:[#allocation3 + $0x18] sm:$0xff]
          %v410 = vld [vmem:[#allocation3 + $0x20] sm:$0xff]
          %v411 = vld [vmem:[#allocation3 + $0x28] sm:$0xff]
          %v412 = vld [vmem:[#allocation3 + $0x30] sm:$0xff]
          %v413 = vld [vmem:[#allocation3 + $0x38] sm:$0xff]
          %v414 = vlaneseq
          %v415 = vshrl.u32 %v414, 7
          %v416 = vsub.s32 0, %v415
          %v417 = vrot.slane %v256, %v416
          %418 = vmatprep.subr.mxu0 0.0
          %419 = vmatpush1.msra.mxu0 %v376
          %420 = vmatprep.subr.mxu0 0.0
          %421 = vmatpush1.msra.mxu0 %v377
          %422 = vmatprep.subr.mxu0 0.0
          %423 = vmatpush1.msra.mxu0 %v378
          %424 = vmatprep.subr.mxu0 0.0
          %425 = vmatpush1.msra.mxu0 %v379
          %426 = vmatprep.subr.mxu0 0.0
          %427 = vmatpush1.msra.mxu0 %v380
          %428 = vmatprep.subr.mxu0 0.0
          %429 = vmatpush1.msra.mxu0 %v381
          %430 = vmatprep.subr.mxu0 0.0
          %431 = vmatpush1.msra.mxu0 %v382
          %432 = vmatprep.subr.mxu0 0.0
          %433 = vmatpush1.msra.mxu0 %v383
          %434 = vmatprep.subr.mxu0 0.0
          %435 = vmatpush1.msra.mxu0 %v384
          %436 = vmatprep.subr.mxu0 0.0
          %437 = vmatpush1.msra.mxu0 %v385
          %438 = vmatprep.subr.mxu0 0.0
          %439 = vmatpush1.msra.mxu0 %v386
          %440 = vmatprep.subr.mxu0 0.0
          %441 = vmatpush1.msra.mxu0 %v387
          %442 = vmatprep.subr.mxu0 0.0
          %443 = vmatpush1.msra.mxu0 %v388
          %444 = vmatprep.subr.mxu0 0.0
          %445 = vmatpush1.msra.mxu0 %v389
          %446 = vmatprep.subr.mxu0 0.0
          %447 = vmatpush1.msra.mxu0 %v390
          %448 = vmatprep.subr.mxu0 0.0
          %449 = vmatpush1.msra.mxu0 %v391
          %450 = vmatprep.subr.mxu0 0.0
          %451 = vmatpush1.msra.mxu0 0.0
          %452 = vmatprep.subr.mxu0 0.0
          %453 = vmatpush1.msra.mxu0 0.0
          %454 = vmatprep.subr.mxu0 0.0
          %455 = vmatpush1.msra.mxu0 0.0
          %456 = vmatprep.subr.mxu0 0.0
          %457 = vmatpush1.msra.mxu0 0.0
          %458 = vmatprep.subr.mxu0 0.0
          %459 = vmatpush1.msra.mxu0 0.0
          %460 = vmatprep.subr.mxu0 0.0
          %461 = vmatpush1.msra.mxu0 0.0
          %462 = vmatprep.subr.mxu0 0.0
          %463 = vmatpush1.msra.mxu0 0.0
          %464 = vmatprep.subr.mxu0 0.0
          %465 = vmatpush1.msra.mxu0 0.0
          %466 = vmatprep.subr.mxu0 0.0
          %467 = vmatpush1.msra.mxu0 0.0
          %468 = vmatprep.subr.mxu0 0.0
          %469 = vmatpush1.msra.mxu0 0.0
          %470 = vmatprep.subr.mxu0 0.0
          %471 = vmatpush1.msra.mxu0 0.0
          %472 = vmatprep.subr.mxu0 0.0
          %473 = vmatpush1.msra.mxu0 0.0
          %474 = vmatprep.subr.mxu0 0.0
          %475 = vmatpush1.msra.mxu0 0.0
          %476 = vmatprep.subr.mxu0 0.0
          %477 = vmatpush1.msra.mxu0 0.0
          %478 = vmatprep.subr.mxu0 0.0
          %479 = vmatpush1.msra.mxu0 0.0
          %480 = vmatprep.subr.mxu0 0.0
          %481 = vmatpush1.msra.mxu0 0.0
          %482 = vmatprep.mubr.f32.mxu0 0.0
          %483 = vmatmul.mubr.f32.gmra.mrb[0].mxu0 %v406
          %v484 = vpop.f32.mrb[0].mxu0
          %v485 = vadd.f32 %v417, %v484
          %v486 = vpop.f32.mrb[0].mxu0
          %487 = vmatprep.mubr.f32.mxu0 0.0
          %488 = vmatmul.mubr.f32.gmra.mrb[0].mxu0 %v407
          %v489 = vpop.f32.mrb[0].mxu0
          %v490 = vadd.f32 %v417, %v489
          %v491 = vpop.f32.mrb[0].mxu0
          %492 = vmatprep.mubr.f32.mxu0 0.0
          %493 = vmatmul.mubr.f32.gmra.mrb[0].mxu0 %v408
          %v494 = vpop.f32.mrb[0].mxu0
          %v495 = vadd.f32 %v417, %v494
          %v496 = vpop.f32.mrb[0].mxu0
          %497 = vmatprep.mubr.f32.mxu0 0.0
          %498 = vmatmul.mubr.f32.gmra.mrb[0].mxu0 %v409
          %v499 = vpop.f32.mrb[0].mxu0
          %v500 = vadd.f32 %v417, %v499
          %v501 = vpop.f32.mrb[0].mxu0
          %502 = vmatprep.mubr.f32.mxu0 0.0
          %503 = vmatmul.mubr.f32.gmra.mrb[0].mxu0 %v410
          %v504 = vpop.f32.mrb[0].mxu0
          %v505 = vadd.f32 %v417, %v504
          %v506 = vpop.f32.mrb[0].mxu0
          %507 = vmatprep.mubr.f32.mxu0 0.0
          %508 = vmatmul.mubr.f32.gmra.mrb[0].mxu0 %v411
          %v509 = vpop.f32.mrb[0].mxu0
          %v510 = vadd.f32 %v417, %v509
          %v511 = vpop.f32.mrb[0].mxu0
          %512 = vmatprep.mubr.f32.mxu0 0.0
          %513 = vmatmul.mubr.f32.gmra.mrb[0].mxu0 %v412
          %v514 = vpop.f32.mrb[0].mxu0
          %v515 = vadd.f32 %v417, %v514
          %v516 = vpop.f32.mrb[0].mxu0
          %517 = vmatprep.mubr.f32.mxu0 0.0
          %518 = vmatmul.mubr.f32.gmra.mrb[0].mxu0 %v413
          %v519 = vpop.f32.mrb[0].mxu0
          %v520 = vadd.f32 %v417, %v519
          %v521 = vpop.f32.mrb[0].mxu0
          %522 = vdwg.mxu0
          %v523 = vsel %vm364, 1, 0
          %v524 = vsel %vm365, 1, 0
          %v525 = vsel %vm366, 1, 0
          %v526 = vsel %vm367, 1, 0
          %v527 = vsel %vm368, 1, 0
          %v528 = vsel %vm369, 1, 0
          %v529 = vsel %vm370, 1, 0
          %v530 = vsel %vm371, 1, 0
          %vm531 = vcmp.eq.s32.totalorder %v523, 1
          %vm532 = vcmp.eq.s32.totalorder %v524, 1
          %vm533 = vcmp.eq.s32.totalorder %v525, 1
          %vm534 = vcmp.eq.s32.totalorder %v526, 1
          %vm535 = vcmp.eq.s32.totalorder %v527, 1
          %vm536 = vcmp.eq.s32.totalorder %v528, 1
          %vm537 = vcmp.eq.s32.totalorder %v529, 1
          %vm538 = vcmp.eq.s32.totalorder %v530, 1
          %v539 = vsel %vm531, %v485, 0.0
          %v540 = vsel %vm532, %v490, 0.0
          %v541 = vsel %vm533, %v495, 0.0
          %v542 = vsel %vm534, %v500, 0.0
          %v543 = vsel %vm535, %v505, 0.0
          %v544 = vsel %vm536, %v510, 0.0
          %v545 = vsel %vm537, %v515, 0.0
          %v546 = vsel %vm538, %v520, 0.0
          %v547 = vld [vmem:[#allocation5] sm:$0x1]
          %v548 = vadd.f32 %v539, %v540
          %v549 = vadd.f32 %v548, %v541
          %v550 = vadd.f32 %v549, %v542
          %v551 = vadd.f32 %v550, %v543
          %v552 = vadd.f32 %v551, %v544
          %v553 = vadd.f32 %v552, %v545
          %v554 = vadd.f32 %v553, %v546
          %v555 = vrot.slane %v554, 4
          %v556 = vadd.f32 %v554, %v555
          %v557 = vrot.slane %v556, 2
          %v558 = vadd.f32 %v556, %v557
          %v559 = vrot.slane %v558, 1
          %v560 = vadd.f32 %v558, %v559
          %v561 = vadd.f32 %v547, %v560
          %562 = vst [vmem:[#allocation5] sm:$0x1] %v561
          %v563 = vld [vmem:[#allocation6] sm:$0x1]
          %v564 = vmul.f32 %v539, %v539
          %v565 = vmul.f32 %v540, %v540
          %v566 = vmul.f32 %v541, %v541
          %v567 = vmul.f32 %v542, %v542
          %v568 = vmul.f32 %v543, %v543
          %v569 = vmul.f32 %v544, %v544
          %v570 = vmul.f32 %v545, %v545
          %v571 = vmul.f32 %v546, %v546
          %v572 = vadd.f32 %v564, %v565
          %v573 = vadd.f32 %v572, %v566
          %v574 = vadd.f32 %v573, %v567
          %v575 = vadd.f32 %v574, %v568
          %v576 = vadd.f32 %v575, %v569
          %v577 = vadd.f32 %v576, %v570
          %v578 = vadd.f32 %v577, %v571
          %v579 = vrot.slane %v578, 4
          %v580 = vadd.f32 %v578, %v579
          %v581 = vrot.slane %v580, 2
          %v582 = vadd.f32 %v580, %v581
          %v583 = vrot.slane %v582, 1
          %v584 = vadd.f32 %v582, %v583
          %v585 = vadd.f32 %v563, %v584
          %586 = vst [vmem:[#allocation6] sm:$0x1] %v585
          %587 = vst [vmem:[#allocation2] sm:$0xff] %v539
          %588 = vst [vmem:[#allocation2 + $0x8] sm:$0xff] %v540
          %589 = vst [vmem:[#allocation2 + $0x10] sm:$0xff] %v541
          %590 = vst [vmem:[#allocation2 + $0x18] sm:$0xff] %v542
          %591 = vst [vmem:[#allocation2 + $0x20] sm:$0xff] %v543
          %592 = vst [vmem:[#allocation2 + $0x28] sm:$0xff] %v544
          %593 = vst [vmem:[#allocation2 + $0x30] sm:$0xff] %v545
          %594 = vst [vmem:[#allocation2 + $0x38] sm:$0xff] %v546
        $region52: #{tpu_custom_call.1} parent=35 // pred_fallthru
          _
        %p595 = scmp.ne.s32.totalorder %s23, 0
        // Predicated region
        $region57: #{tpu_custom_call.1} parent=35 // pred_check
          %p596 = pneg %p595
        $region58: #{tpu_custom_call.1} parent=35 // pred_check_branch
          %598 = sbr.rel (%p596) target = $region60
        $region59: #{tpu_custom_call.1} parent=35 // pred_region
          %v599 = vld [vmem:[%s218] sm:$0xff]
          %v600 = vld [vmem:[%s218 + $0x8] sm:$0xff]
          %v601 = vld [vmem:[%s218 + $0x10] sm:$0xff]
          %v602 = vld [vmem:[%s218 + $0x18] sm:$0xff]
          %v603 = vld [vmem:[%s218 + $0x20] sm:$0xff]
          %v604 = vld [vmem:[%s218 + $0x28] sm:$0xff]
          %v605 = vld [vmem:[%s218 + $0x30] sm:$0xff]
          %v606 = vld [vmem:[%s218 + $0x38] sm:$0xff]
          %v607 = vld [vmem:[%s218 + $0x40] sm:$0xff]
          %v608 = vld [vmem:[%s218 + $0x48] sm:$0xff]
          %v609 = vld [vmem:[%s218 + $0x50] sm:$0xff]
          %v610 = vld [vmem:[%s218 + $0x58] sm:$0xff]
          %v611 = vld [vmem:[%s218 + $0x60] sm:$0xff]
          %v612 = vld [vmem:[%s218 + $0x68] sm:$0xff]
          %v613 = vld [vmem:[%s218 + $0x70] sm:$0xff]
          %v614 = vld [vmem:[%s218 + $0x78] sm:$0xff]
          %v615 = vld [vmem:[#allocation2] sm:$0xff]
          %v616 = vld [vmem:[#allocation2 + $0x8] sm:$0xff]
          %v617 = vld [vmem:[#allocation2 + $0x10] sm:$0xff]
          %v618 = vld [vmem:[#allocation2 + $0x18] sm:$0xff]
          %v619 = vld [vmem:[#allocation2 + $0x20] sm:$0xff]
          %v620 = vld [vmem:[#allocation2 + $0x28] sm:$0xff]
          %v621 = vld [vmem:[#allocation2 + $0x30] sm:$0xff]
          %v622 = vld [vmem:[#allocation2 + $0x38] sm:$0xff]
          %v623 = vlaneseq
          %v624 = vshrl.u32 %v623, 7
          %v625 = vsub.s32 0, %v624
          %v626 = vrot.slane %v256, %v625
          %627 = vmatprep.subr.mxu0 0.0
          %628 = vmatpush1.msra.mxu0 %v599
          %629 = vmatprep.subr.mxu0 0.0
          %630 = vmatpush1.msra.mxu0 %v600
          %631 = vmatprep.subr.mxu0 0.0
          %632 = vmatpush1.msra.mxu0 %v601
          %633 = vmatprep.subr.mxu0 0.0
          %634 = vmatpush1.msra.mxu0 %v602
          %635 = vmatprep.subr.mxu0 0.0
          %636 = vmatpush1.msra.mxu0 %v603
          %637 = vmatprep.subr.mxu0 0.0
          %638 = vmatpush1.msra.mxu0 %v604
          %639 = vmatprep.subr.mxu0 0.0
          %640 = vmatpush1.msra.mxu0 %v605
          %641 = vmatprep.subr.mxu0 0.0
          %642 = vmatpush1.msra.mxu0 %v606
          %643 = vmatprep.subr.mxu0 0.0
          %644 = vmatpush1.msra.mxu0 %v607
          %645 = vmatprep.subr.mxu0 0.0
          %646 = vmatpush1.msra.mxu0 %v608
          %647 = vmatprep.subr.mxu0 0.0
          %648 = vmatpush1.msra.mxu0 %v609
          %649 = vmatprep.subr.mxu0 0.0
          %650 = vmatpush1.msra.mxu0 %v610
          %651 = vmatprep.subr.mxu0 0.0
          %652 = vmatpush1.msra.mxu0 %v611
          %653 = vmatprep.subr.mxu0 0.0
          %654 = vmatpush1.msra.mxu0 %v612
          %655 = vmatprep.subr.mxu0 0.0
          %656 = vmatpush1.msra.mxu0 %v613
          %657 = vmatprep.subr.mxu0 0.0
          %658 = vmatpush1.msra.mxu0 %v614
          %659 = vmatprep.subr.mxu0 0.0
          %660 = vmatpush1.msra.mxu0 0.0
          %661 = vmatprep.subr.mxu0 0.0
          %662 = vmatpush1.msra.mxu0 0.0
          %663 = vmatprep.subr.mxu0 0.0
          %664 = vmatpush1.msra.mxu0 0.0
          %665 = vmatprep.subr.mxu0 0.0
          %666 = vmatpush1.msra.mxu0 0.0
          %667 = vmatprep.subr.mxu0 0.0
          %668 = vmatpush1.msra.mxu0 0.0
          %669 = vmatprep.subr.mxu0 0.0
          %670 = vmatpush1.msra.mxu0 0.0
          %671 = vmatprep.subr.mxu0 0.0
          %672 = vmatpush1.msra.mxu0 0.0
          %673 = vmatprep.subr.mxu0 0.0
          %674 = vmatpush1.msra.mxu0 0.0
          %675 = vmatprep.subr.mxu0 0.0
          %676 = vmatpush1.msra.mxu0 0.0
          %677 = vmatprep.subr.mxu0 0.0
          %678 = vmatpush1.msra.mxu0 0.0
          %679 = vmatprep.subr.mxu0 0.0
          %680 = vmatpush1.msra.mxu0 0.0
          %681 = vmatprep.subr.mxu0 0.0
          %682 = vmatpush1.msra.mxu0 0.0
          %683 = vmatprep.subr.mxu0 0.0
          %684 = vmatpush1.msra.mxu0 0.0
          %685 = vmatprep.subr.mxu0 0.0
          %686 = vmatpush1.msra.mxu0 0.0
          %687 = vmatprep.subr.mxu0 0.0
          %688 = vmatpush1.msra.mxu0 0.0
          %689 = vmatprep.subr.mxu0 0.0
          %690 = vmatpush1.msra.mxu0 0.0
          %691 = vmatprep.mubr.f32.mxu0 0.0
          %692 = vmatmul.mubr.f32.gmra.mrb[0].mxu0 %v615
          %v693 = vpop.f32.mrb[0].mxu0
          %v694 = vadd.f32 %v626, %v693
          %v695 = vpop.f32.mrb[0].mxu0
          %696 = vmatprep.mubr.f32.mxu0 0.0
          %697 = vmatmul.mubr.f32.gmra.mrb[0].mxu0 %v616
          %v698 = vpop.f32.mrb[0].mxu0
          %v699 = vadd.f32 %v626, %v698
          %v700 = vpop.f32.mrb[0].mxu0
          %701 = vmatprep.mubr.f32.mxu0 0.0
          %702 = vmatmul.mubr.f32.gmra.mrb[0].mxu0 %v617
          %v703 = vpop.f32.mrb[0].mxu0
          %v704 = vadd.f32 %v626, %v703
          %v705 = vpop.f32.mrb[0].mxu0
          %706 = vmatprep.mubr.f32.mxu0 0.0
          %707 = vmatmul.mubr.f32.gmra.mrb[0].mxu0 %v618
          %v708 = vpop.f32.mrb[0].mxu0
          %v709 = vadd.f32 %v626, %v708
          %v710 = vpop.f32.mrb[0].mxu0
          %711 = vmatprep.mubr.f32.mxu0 0.0
          %712 = vmatmul.mubr.f32.gmra.mrb[0].mxu0 %v619
          %v713 = vpop.f32.mrb[0].mxu0
          %v714 = vadd.f32 %v626, %v713
          %v715 = vpop.f32.mrb[0].mxu0
          %716 = vmatprep.mubr.f32.mxu0 0.0
          %717 = vmatmul.mubr.f32.gmra.mrb[0].mxu0 %v620
          %v718 = vpop.f32.mrb[0].mxu0
          %v719 = vadd.f32 %v626, %v718
          %v720 = vpop.f32.mrb[0].mxu0
          %721 = vmatprep.mubr.f32.mxu0 0.0
          %722 = vmatmul.mubr.f32.gmra.mrb[0].mxu0 %v621
          %v723 = vpop.f32.mrb[0].mxu0
          %v724 = vadd.f32 %v626, %v723
          %v725 = vpop.f32.mrb[0].mxu0
          %726 = vmatprep.mubr.f32.mxu0 0.0
          %727 = vmatmul.mubr.f32.gmra.mrb[0].mxu0 %v622
          %v728 = vpop.f32.mrb[0].mxu0
          %v729 = vadd.f32 %v626, %v728
          %v730 = vpop.f32.mrb[0].mxu0
          %731 = vdwg.mxu0
          %v732 = vsel %vm364, 1, 0
          %v733 = vsel %vm365, 1, 0
          %v734 = vsel %vm366, 1, 0
          %v735 = vsel %vm367, 1, 0
          %v736 = vsel %vm368, 1, 0
          %v737 = vsel %vm369, 1, 0
          %v738 = vsel %vm370, 1, 0
          %v739 = vsel %vm371, 1, 0
          %vm740 = vcmp.eq.s32.totalorder %v732, 1
          %vm741 = vcmp.eq.s32.totalorder %v733, 1
          %vm742 = vcmp.eq.s32.totalorder %v734, 1
          %vm743 = vcmp.eq.s32.totalorder %v735, 1
          %vm744 = vcmp.eq.s32.totalorder %v736, 1
          %vm745 = vcmp.eq.s32.totalorder %v737, 1
          %vm746 = vcmp.eq.s32.totalorder %v738, 1
          %vm747 = vcmp.eq.s32.totalorder %v739, 1
          %v748 = vsel %vm740, %v694, 0.0
          %v749 = vsel %vm741, %v699, 0.0
          %v750 = vsel %vm742, %v704, 0.0
          %v751 = vsel %vm743, %v709, 0.0
          %v752 = vsel %vm744, %v714, 0.0
          %v753 = vsel %vm745, %v719, 0.0
          %v754 = vsel %vm746, %v724, 0.0
          %v755 = vsel %vm747, %v729, 0.0
          %v756 = vld [vmem:[#allocation5] sm:$0x1]
          %v757 = vadd.f32 %v748, %v749
          %v758 = vadd.f32 %v757, %v750
          %v759 = vadd.f32 %v758, %v751
          %v760 = vadd.f32 %v759, %v752
          %v761 = vadd.f32 %v760, %v753
          %v762 = vadd.f32 %v761, %v754
          %v763 = vadd.f32 %v762, %v755
          %v764 = vrot.slane %v763, 4
          %v765 = vadd.f32 %v763, %v764
          %v766 = vrot.slane %v765, 2
          %v767 = vadd.f32 %v765, %v766
          %v768 = vrot.slane %v767, 1
          %v769 = vadd.f32 %v767, %v768
          %v770 = vadd.f32 %v756, %v769
          %771 = vst [vmem:[#allocation5] sm:$0x1] %v770
          %v772 = vld [vmem:[#allocation6] sm:$0x1]
          %v773 = vmul.f32 %v748, %v748
          %v774 = vmul.f32 %v749, %v749
          %v775 = vmul.f32 %v750, %v750
          %v776 = vmul.f32 %v751, %v751
          %v777 = vmul.f32 %v752, %v752
          %v778 = vmul.f32 %v753, %v753
          %v779 = vmul.f32 %v754, %v754
          %v780 = vmul.f32 %v755, %v755
          %v781 = vadd.f32 %v773, %v774
          %v782 = vadd.f32 %v781, %v775
          %v783 = vadd.f32 %v782, %v776
          %v784 = vadd.f32 %v783, %v777
          %v785 = vadd.f32 %v784, %v778
          %v786 = vadd.f32 %v785, %v779
          %v787 = vadd.f32 %v786, %v780
          %v788 = vrot.slane %v787, 4
          %v789 = vadd.f32 %v787, %v788
          %v790 = vrot.slane %v789, 2
          %v791 = vadd.f32 %v789, %v790
          %v792 = vrot.slane %v791, 1
          %v793 = vadd.f32 %v791, %v792
          %v794 = vadd.f32 %v772, %v793
          %795 = vst [vmem:[#allocation6] sm:$0x1] %v794
          %796 = vst [vmem:[#allocation2] sm:$0xff] %v748
          %797 = vst [vmem:[#allocation2 + $0x8] sm:$0xff] %v749
          %798 = vst [vmem:[#allocation2 + $0x10] sm:$0xff] %v750
          %799 = vst [vmem:[#allocation2 + $0x18] sm:$0xff] %v751
          %800 = vst [vmem:[#allocation2 + $0x20] sm:$0xff] %v752
          %801 = vst [vmem:[#allocation2 + $0x28] sm:$0xff] %v753
          %802 = vst [vmem:[#allocation2 + $0x30] sm:$0xff] %v754
          %803 = vst [vmem:[#allocation2 + $0x38] sm:$0xff] %v755
        $region60: #{tpu_custom_call.1} parent=35 // pred_fallthru
          _
        %v804 = vld [vmem:[#allocation5] sm:$0x1]
        %v805 = vmul.f32 %v804, 0.0625
        %v806 = vld [vmem:[#allocation6] sm:$0x1]
        %v807 = vmul.f32 %v806, 0.0625
        %v808 = vmul.f32 %v805, %v805
        %v809 = vsub.f32 %v807, %v808
        %v810 = vmax.f32 %v809, 0.0
        %v811 = vadd.f32 %v810, 1e-05
        %v812 = vrsqrt.pop %v811
        %v814 = vlaneseq
        %v815 = vshrl.u32 %v814, 7
        %v816 = vsub.s32 0, %v815
        %v817 = vrot.slane %v812, %v816
        %v819 = vmul.f32 %v256, %v817
        %v821 = vlaneseq
        %v822 = vshrl.u32 %v821, 7
        %v823 = vsub.s32 0, %v822
        %v824 = vrot.slane %v805, %v823
        %v826 = vmul.f32 %v819, %v824
        %v828 = vrot.slane %v826, 7
        %v830 = vsub.f32 %v256, %v828
        %p831 = scmp.lt.s32.totalorder %s23, 1
        // Predicated region
        $region61: #{tpu_custom_call.1} parent=35 // pred_check
          %p832 = pneg %p831
        $region62: #{tpu_custom_call.1} parent=35 // pred_check_branch
          %834 = sbr.rel (%p832) target = $region64
        $region63: #{tpu_custom_call.1} parent=35 // pred_region
          %v835 = vld [vmem:[#allocation2] sm:$0xff]
          %v836 = vlaneseq
          %v837 = vshrl.u32 %v836, 7
          %v838 = vsub.s32 1, %v837
          %v839 = vrot.slane %v819, %v838
          %v840 = vmul.f32 %v839, %v835
          %v841 = vlaneseq
          %v842 = vshrl.u32 %v841, 7
          %v843 = vsub.s32 2, %v842
          %v844 = vrot.slane %v830, %v843
          %v845 = vadd.f32 %v840, %v844
          %v846 = vlaneseq
          %v847 = vshrl.u32 %v846, 7
          %v848 = vsub.s32 3, %v847
          %v849 = vrot.slane %v256, %v848
          %v850 = vmul.f32 %v849, 0.0
          %v851 = vadd.f32 %v845, %v850
          %v852 = vmax.f32 %v851, 0.0
          %853 = vst [vmem:[#allocation2] sm:$0xff] %v852
          %s854 = scalar_lea.vmem [#allocation2], 8
          %v855 = vld [vmem:[%s854] sm:$0xff]
          %v856 = vmul.f32 %v839, %v855
          %v857 = vadd.f32 %v856, %v844
          %v858 = vmul.f32 %v849, %v852
          %v859 = vadd.f32 %v857, %v858
          %v860 = vmax.f32 %v859, 0.0
          %861 = vst [vmem:[%s854] sm:$0xff] %v860
          %s862 = scalar_lea.vmem [#allocation2], 16
          %v863 = vld [vmem:[%s862] sm:$0xff]
          %v864 = vmul.f32 %v839, %v863
          %v865 = vadd.f32 %v864, %v844
          %v866 = vmul.f32 %v849, %v860
          %v867 = vadd.f32 %v865, %v866
          %v868 = vmax.f32 %v867, 0.0
          %869 = vst [vmem:[%s862] sm:$0xff] %v868
          %s870 = scalar_lea.vmem [#allocation2], 24
          %v871 = vld [vmem:[%s870] sm:$0xff]
          %v872 = vmul.f32 %v839, %v871
          %v873 = vadd.f32 %v872, %v844
          %v874 = vmul.f32 %v849, %v868
          %v875 = vadd.f32 %v873, %v874
          %v876 = vmax.f32 %v875, 0.0
          %877 = vst [vmem:[%s870] sm:$0xff] %v876
          %s878 = scalar_lea.vmem [#allocation2], 32
          %v879 = vld [vmem:[%s878] sm:$0xff]
          %v880 = vmul.f32 %v839, %v879
          %v881 = vadd.f32 %v880, %v844
          %v882 = vmul.f32 %v849, %v876
          %v883 = vadd.f32 %v881, %v882
          %v884 = vmax.f32 %v883, 0.0
          %885 = vst [vmem:[%s878] sm:$0xff] %v884
          %s886 = scalar_lea.vmem [#allocation2], 40
          %v887 = vld [vmem:[%s886] sm:$0xff]
          %v888 = vmul.f32 %v839, %v887
          %v889 = vadd.f32 %v888, %v844
          %v890 = vmul.f32 %v849, %v884
          %v891 = vadd.f32 %v889, %v890
          %v892 = vmax.f32 %v891, 0.0
          %893 = vst [vmem:[%s886] sm:$0xff] %v892
          %s894 = scalar_lea.vmem [#allocation2], 48
          %v895 = vld [vmem:[%s894] sm:$0xff]
          %v896 = vmul.f32 %v839, %v895
          %v897 = vadd.f32 %v896, %v844
          %v898 = vmul.f32 %v849, %v892
          %v899 = vadd.f32 %v897, %v898
          %v900 = vmax.f32 %v899, 0.0
          %901 = vst [vmem:[%s894] sm:$0xff] %v900
          %s902 = scalar_lea.vmem [#allocation2], 56
          %v903 = vld [vmem:[%s902] sm:$0xff]
          %v904 = vmul.f32 %v839, %v903
          %v905 = vadd.f32 %v904, %v844
          %v906 = vmul.f32 %v849, %v900
          %v907 = vadd.f32 %v905, %v906
          %v908 = vmax.f32 %v907, 0.0
          %909 = vst [vmem:[%s902] sm:$0xff] %v908
        $region64: #{tpu_custom_call.1} parent=35 // pred_fallthru
          _
        %p910 = scmp.eq.s32.totalorder %s23, 1
        // Predicated region
        $region65: #{tpu_custom_call.1} parent=35 // pred_check
          %p911 = pneg %p910
        $region66: #{tpu_custom_call.1} parent=35 // pred_check_branch
          %913 = sbr.rel (%p911) target = $region68
        $region67: #{tpu_custom_call.1} parent=35 // pred_region
          %v914 = vld [vmem:[#allocation2] sm:$0xff]
          %v915 = vlaneseq
          %v916 = vshrl.u32 %v915, 7
          %v917 = vsub.s32 1, %v916
          %v918 = vrot.slane %v819, %v917
          %v919 = vmul.f32 %v918, %v914
          %v920 = vlaneseq
          %v921 = vshrl.u32 %v920, 7
          %v922 = vsub.s32 2, %v921
          %v923 = vrot.slane %v830, %v922
          %v924 = vadd.f32 %v919, %v923
          %v925 = vlaneseq
          %v926 = vshrl.u32 %v925, 7
          %v927 = vsub.s32 3, %v926
          %v928 = vrot.slane %v256, %v927
          %v929 = vmul.f32 %v928, 0.0
          %v930 = vadd.f32 %v924, %v929
          %v931 = vmax.f32 %v930, 0.0
          %s932 = scalar_lea.vmem [#allocation2], 8
          %v933 = vld [vmem:[%s932] sm:$0xff]
          %v934 = vmul.f32 %v918, %v933
          %v935 = vadd.f32 %v934, %v923
          %v936 = vmul.f32 %v928, %v931
          %v937 = vadd.f32 %v935, %v936
          %v938 = vmax.f32 %v937, 0.0
          %s939 = scalar_lea.vmem [#allocation2], 16
          %v940 = vld [vmem:[%s939] sm:$0xff]
          %v941 = vmul.f32 %v918, %v940
          %v942 = vadd.f32 %v941, %v923
          %v943 = vmul.f32 %v928, %v938
          %v944 = vadd.f32 %v942, %v943
          %v945 = vmax.f32 %v944, 0.0
          %s946 = scalar_lea.vmem [#allocation2], 24
          %v947 = vld [vmem:[%s946] sm:$0xff]
          %v948 = vmul.f32 %v918, %v947
          %v949 = vadd.f32 %v948, %v923
          %v950 = vmul.f32 %v928, %v945
          %v951 = vadd.f32 %v949, %v950
          %v952 = vmax.f32 %v951, 0.0
          %s953 = scalar_lea.vmem [#allocation2], 32
          %v954 = vld [vmem:[%s953] sm:$0xff]
          %v955 = vmul.f32 %v918, %v954
          %v956 = vadd.f32 %v955, %v923
          %v957 = vmul.f32 %v928, %v952
          %v958 = vadd.f32 %v956, %v957
          %v959 = vmax.f32 %v958, 0.0
          %s960 = scalar_lea.vmem [#allocation2], 40
          %v961 = vld [vmem:[%s960] sm:$0xff]
          %v962 = vmul.f32 %v918, %v961
          %v963 = vadd.f32 %v962, %v923
          %v964 = vmul.f32 %v928, %v959
          %v965 = vadd.f32 %v963, %v964
          %v966 = vmax.f32 %v965, 0.0
          %s967 = scalar_lea.vmem [#allocation2], 48
          %v968 = vld [vmem:[%s967] sm:$0xff]
          %v969 = vmul.f32 %v918, %v968
          %v970 = vadd.f32 %v969, %v923
          %v971 = vmul.f32 %v928, %v966
          %v972 = vadd.f32 %v970, %v971
          %v973 = vmax.f32 %v972, 0.0
          %s974 = scalar_lea.vmem [#allocation2], 56
          %v975 = vld [vmem:[%s974] sm:$0xff]
          %v976 = vmul.f32 %v918, %v975
          %v977 = vadd.f32 %v976, %v923
          %v978 = vmul.f32 %v928, %v973
          %v979 = vadd.f32 %v977, %v978
          %v980 = vmax.f32 %v979, 0.0
          %v981 = vld [vmem:[#allocation12] sm:$0xff]
          %v982 = vld [vmem:[#allocation12 + $0x8] sm:$0xff]
          %v983 = vld [vmem:[#allocation12 + $0x10] sm:$0xff]
          %v984 = vld [vmem:[#allocation12 + $0x18] sm:$0xff]
          %v985 = vld [vmem:[#allocation12 + $0x20] sm:$0xff]
          %v986 = vld [vmem:[#allocation12 + $0x28] sm:$0xff]
          %v987 = vld [vmem:[#allocation12 + $0x30] sm:$0xff]
          %v988 = vld [vmem:[#allocation12 + $0x38] sm:$0xff]
          %v989 = vld [vmem:[#allocation12 + $0x40] sm:$0xff]
          %v990 = vld [vmem:[#allocation12 + $0x48] sm:$0xff]
          %v991 = vld [vmem:[#allocation12 + $0x50] sm:$0xff]
          %v992 = vld [vmem:[#allocation12 + $0x58] sm:$0xff]
          %v993 = vld [vmem:[#allocation12 + $0x60] sm:$0xff]
          %v994 = vld [vmem:[#allocation12 + $0x68] sm:$0xff]
          %v995 = vld [vmem:[#allocation12 + $0x70] sm:$0xff]
          %v996 = vld [vmem:[#allocation12 + $0x78] sm:$0xff]
          %v997 = vld [vmem:[%s4] sm:$0x1]
          %v999 = vlaneseq
          %v1000 = vshrl.u32 %v999, 7
          %v1001 = vsub.s32 0, %v1000
          %v1002 = vrot.slane %v997, %v1001
          %1004 = vmatprep.subr.mxu0 0.0
          %1005 = vmatpush1.msra.mxu0 %v981
          %1006 = vmatprep.subr.mxu0 0.0
          %1007 = vmatpush1.msra.mxu0 %v982
          %1008 = vmatprep.subr.mxu0 0.0
          %1009 = vmatpush1.msra.mxu0 %v983
          %1010 = vmatprep.subr.mxu0 0.0
          %1011 = vmatpush1.msra.mxu0 %v984
          %1012 = vmatprep.subr.mxu0 0.0
          %1013 = vmatpush1.msra.mxu0 %v985
          %1014 = vmatprep.subr.mxu0 0.0
          %1015 = vmatpush1.msra.mxu0 %v986
          %1016 = vmatprep.subr.mxu0 0.0
          %1017 = vmatpush1.msra.mxu0 %v987
          %1018 = vmatprep.subr.mxu0 0.0
          %1019 = vmatpush1.msra.mxu0 %v988
          %1020 = vmatprep.subr.mxu0 0.0
          %1021 = vmatpush1.msra.mxu0 %v989
          %1022 = vmatprep.subr.mxu0 0.0
          %1023 = vmatpush1.msra.mxu0 %v990
          %1024 = vmatprep.subr.mxu0 0.0
          %1025 = vmatpush1.msra.mxu0 %v991
          %1026 = vmatprep.subr.mxu0 0.0
          %1027 = vmatpush1.msra.mxu0 %v992
          %1028 = vmatprep.subr.mxu0 0.0
          %1029 = vmatpush1.msra.mxu0 %v993
          %1030 = vmatprep.subr.mxu0 0.0
          %1031 = vmatpush1.msra.mxu0 %v994
          %1032 = vmatprep.subr.mxu0 0.0
          %1033 = vmatpush1.msra.mxu0 %v995
          %1034 = vmatprep.subr.mxu0 0.0
          %1035 = vmatpush1.msra.mxu0 %v996
          %1036 = vmatprep.subr.mxu0 0.0
          %1037 = vmatpush1.msra.mxu0 0.0
          %1038 = vmatprep.subr.mxu0 0.0
          %1039 = vmatpush1.msra.mxu0 0.0
          %1040 = vmatprep.subr.mxu0 0.0
          %1041 = vmatpush1.msra.mxu0 0.0
          %1042 = vmatprep.subr.mxu0 0.0
          %1043 = vmatpush1.msra.mxu0 0.0
          %1044 = vmatprep.subr.mxu0 0.0
          %1045 = vmatpush1.msra.mxu0 0.0
          %1046 = vmatprep.subr.mxu0 0.0
          %1047 = vmatpush1.msra.mxu0 0.0
          %1048 = vmatprep.subr.mxu0 0.0
          %1049 = vmatpush1.msra.mxu0 0.0
          %1050 = vmatprep.subr.mxu0 0.0
          %1051 = vmatpush1.msra.mxu0 0.0
          %1052 = vmatprep.subr.mxu0 0.0
          %1053 = vmatpush1.msra.mxu0 0.0
          %1054 = vmatprep.subr.mxu0 0.0
          %1055 = vmatpush1.msra.mxu0 0.0
          %1056 = vmatprep.subr.mxu0 0.0
          %1057 = vmatpush1.msra.mxu0 0.0
          %1058 = vmatprep.subr.mxu0 0.0
          %1059 = vmatpush1.msra.mxu0 0.0
          %1060 = vmatprep.subr.mxu0 0.0
          %1061 = vmatpush1.msra.mxu0 0.0
          %1062 = vmatprep.subr.mxu0 0.0
          %1063 = vmatpush1.msra.mxu0 0.0
          %1064 = vmatprep.subr.mxu0 0.0
          %1065 = vmatpush1.msra.mxu0 0.0
          %1066 = vmatprep.subr.mxu0 0.0
          %1067 = vmatpush1.msra.mxu0 0.0
          %1068 = vmatprep.mubr.f32.mxu0 0.0
          %1069 = vmatmul.mubr.f32.gmra.mrb[0].mxu0 %v980
          %v1070 = vpop.f32.mrb[0].mxu0
          %v1071 = vadd.f32 %v1002, %v1070
          %v1072 = vpop.f32.mrb[0].mxu0
          %1073 = vdwg.mxu0
          %1074 = vst [vmem:[#allocation13] sm:$0xff] %v1071
        $region68: #{tpu_custom_call.1} parent=35 // pred_fallthru
          _
        // Predicated region
        $region69: #{tpu_custom_call.1} parent=35 // pred_check
          %p1075 = pneg %p130
        $region70: #{tpu_custom_call.1} parent=35 // pred_check_branch
          %1077 = sbr.rel (%p1075) target = $region72
        $region71: #{tpu_custom_call.1} parent=35 // pred_region
          %s1079 = ssub.s32 128, 128
          %1080 = vsyncadd [#allocation9], %s1079
          %s1082 = sshll.u32 [#allocation13], 4
          %s1083 = int_to_ptr.vmem [resolvable:$true] %s1082
          %1085 = dma.vmem_to_hbm [thread:$0]  %s1083, 128, %s5, [#allocation9]
        $region72: #{tpu_custom_call.1} parent=35 // pred_fallthru
          _
        // Predicated region
        $region73: #{tpu_custom_call.1} parent=35 // pred_check
          %p1086 = pneg %p130
        $region74: #{tpu_custom_call.1} parent=35 // pred_check_branch
          %1088 = sbr.rel (%p1086) target = $region76
        $region75: #{tpu_custom_call.1} parent=35 // pred_region
          %1089 = dma.done [#allocation9], 128
        $region76: #{tpu_custom_call.1} parent=35 // pred_fallthru
          _
      $region36: #{tpu_custom_call.1} parent=5 // pred_fallthru
        _
      %p1090 = scmp.le.s32.totalorder 2, %s18
      // Predicated region
      $region77: #{tpu_custom_call.1} parent=5 // pred_check
        %p1091 = pneg %p1090
      $region78: #{tpu_custom_call.1} parent=5 // pred_check_branch
        %1093 = sbr.rel (%p1091) target = $region80
      $region79: #{tpu_custom_call.1} parent=5 // pred_region
        %s1094 = ssub.s32 %s18, 2
      $region80: #{tpu_custom_call.1} parent=5 // pred_fallthru
        _
    $region6: #{tpu_custom_call.1} parent=1 // loop_footer
      %s22 = sadd.s32 1, %s18
    $region7: #{tpu_custom_call.1} parent=1 // loop_footer_branch
      %17 = sbr.rel target = $region3
    $region8: #{tpu_custom_call.1} parent=1 // loop_exit
      _
    %1095 = vsyncpa [#allocation8], 1
    %s1096 = scalar_lea.sflag [#allocation8], 1
    %1097 = vsyncpa %s1096, 1
    %1098 = vsyncpa [#allocation11], 1
    %s1099 = scalar_lea.sflag [#allocation11], 1
    %1100 = vsyncpa %s1099, 1
    %1101 = vsyncpa [#allocation9], 1
    %s1102 = scalar_lea.sflag [#allocation9], 1
    %1103 = vsyncpa %s1102, 1
  %1104 = vsyncmov [#allocation4]
  %s1105 = vpop.sfrf %1104
  %p1106 = scmp.eq.s32.totalorder %s1105, 0
  %p1107 = pneg %p1106
  %1109 = shalt.err (%p1107)
  %s1110 = scalar_lea.sflag [#allocation4], 1
  %1111 = vsyncmov %s1110
  %s1112 = vpop.sfrf %1111
  %p1113 = scmp.eq.s32.totalorder %s1112, 0
  %p1114 = pneg %p1113
  %1116 = shalt.err (%p1114)

</llo_original>
